<compile_context>
chip_gen: v5e
topology: v5e:2x2
jax: 0.10.0
libtpu: 0.0.40
codegen_flags: <defaults>
</compile_context>

<pallas_src>
import functools

import jax
import jax.numpy as jnp
from jax.experimental import pallas as pl
from jax.experimental.pallas import tpu as pltpu


LG = 128  # lane group: per-gate width and MLP-head width (requires H, M, L <= 128)


def _round8(n):
    return ((n + 7) // 8) * 8


def _slab_offsets(Dp, Sp):
    """Row offsets of each parameter block inside the packed (rows, 3*LG) slab.
    All offsets are multiples of 8 (sublane-aligned)."""
    r_wih = 0                    # (Dp, 3*LG)   fused W_ih^T, per-gate lane groups
    r_whh = r_wih + Dp           # (LG, 3*LG)   fused W_hh^T
    r_bias = r_whh + LG          # row 0: b_ih fused, row 1: b_hh fused (block of 8)
    r_fc1w = r_bias + 8          # (LG, LG)     fc1 weight for h      (cols 0..M-1)
    r_fc1s = r_fc1w + LG         # (Sp, LG)     fc1 weight for static (cols 0..M-1)
    r_fc1b = r_fc1s + Sp         # row 0: fc1 bias (block of 8)
    r_fc2w = r_fc1b + 8          # (LG, LG)     fc2 weight            (cols 0..L-1)
    r_fc2b = r_fc2w + LG         # row 0: fc2 bias (block of 8)
    total = r_fc2b + 8
    return r_wih, r_whh, r_bias, r_fc1w, r_fc1s, r_fc1b, r_fc2w, r_fc2b, total


# ----------------------------------------------------------------------------
# Pallas kernel: hoisted fused input projection (all timesteps), unrolled GRU
# recurrence with h carried in vregs, and the MLP head. Gridless (one call).
# ----------------------------------------------------------------------------
def _gru_mlp_kernel(x_ref, xs_ref, p_ref, out_ref, gx_ref):
    TB, Dp = x_ref.shape          # (T*Bp, Dp)
    Bp, Sp = xs_ref.shape         # (Bp, Sp)
    T = TB // Bp
    (r_wih, r_whh, r_bias, r_fc1w, r_fc1s,
     r_fc1b, r_fc2w, r_fc2b, _) = _slab_offsets(Dp, Sp)

    # ---- hoisted input projection for ALL timesteps: one fused matmul ----
    # gx[:, g*LG : g*LG+H] holds gate g's x-projection (+ b_ih); padding lanes 0.
    gx_ref[...] = (
        jnp.dot(x_ref[...], p_ref[r_wih:r_wih + Dp, :],
                preferred_element_type=jnp.float32)
        + p_ref[r_bias:r_bias + 1, :])

    # ---- recurrence: fully unrolled, h in vregs, one fused MXU pass / step ----
    # h is lane-padded to LG (lanes H..LG-1 stay exactly 0 by construction).
    h = jnp.zeros((Bp, LG), jnp.float32)
    for t in range(T):
        lo = t * Bp                                       # multiple of 8 -> aligned
        gx_t = gx_ref[lo:lo + Bp, :]                      # (Bp, 3*LG), 3 vregs
        gh = (jnp.dot(h, p_ref[r_whh:r_whh + LG, :],
                      preferred_element_type=jnp.float32)
              + p_ref[r_bias + 1:r_bias + 2, :])          # (Bp, 3*LG)
        # r and z in one shot: sigmoid(x) = 0.5*(1 + tanh(0.5*x)) -> 1 EUP push/vreg.
        rz = 0.5 * (jnp.tanh(0.5 * (gx_t[:, :2 * LG] + gh[:, :2 * LG])) + 1.0)
        r = rz[:, :LG]                                    # free lane-group slices
        z = rz[:, LG:]
        n = jnp.tanh(gx_t[:, 2 * LG:] + r * gh[:, 2 * LG:])   # PyTorch: r*(W_hn h + b_hn)
        h = (1.0 - z) * n + z * h

    # ---- MLP head: split matmul instead of lane-concat([h, x_static]) ----
    pre1 = (jnp.dot(h, p_ref[r_fc1w:r_fc1w + LG, :LG],
                    preferred_element_type=jnp.float32)
            + jnp.dot(xs_ref[...], p_ref[r_fc1s:r_fc1s + Sp, :LG],
                      preferred_element_type=jnp.float32)
            + p_ref[r_fc1b:r_fc1b + 1, :LG])
    act1 = jnp.maximum(pre1, 0.0)                         # ReLU
    out_ref[...] = (jnp.dot(act1, p_ref[r_fc2w:r_fc2w + LG, :LG],
                            preferred_element_type=jnp.float32)
                    + p_ref[r_fc2b:r_fc2b + 1, :LG])      # lane-dense (Bp, LG) store


# ----------------------------------------------------------------------------
# One-time parameter packing (hoisted out of the per-call path).
# ----------------------------------------------------------------------------
def prepare_params(params, *, num_dynamic_feature, num_static_feature,
                   gru_hidden_size, mlp_hidden_size, output_sequence_length):
    D, S, H = num_dynamic_feature, num_static_feature, gru_hidden_size
    M, L = mlp_hidden_size, output_sequence_length
    assert H <= LG and M <= LG and L <= LG
    Dp = _round8(max(D, 1))
    Sp = _round8(max(S, 1))
    (r_wih, r_whh, r_bias, r_fc1w, r_fc1s,
     r_fc1b, r_fc2w, r_fc2b, total) = _slab_offsets(Dp, Sp)

    slab = jnp.zeros((total, 3 * LG), jnp.float32)
    w_ih, w_hh = params["w_ih"], params["w_hh"]          # (3H, D), (3H, H); gates r,z,n
    b_ih, b_hh = params["b_ih"], params["b_hh"]          # (3H,)
    for g in range(3):
        c = g * LG
        slab = slab.at[r_wih:r_wih + D, c:c + H].set(w_ih[g * H:(g + 1) * H, :].T)
        slab = slab.at[r_whh:r_whh + H, c:c + H].set(w_hh[g * H:(g + 1) * H, :].T)
        slab = slab.at[r_bias, c:c + H].set(b_ih[g * H:(g + 1) * H])
        slab = slab.at[r_bias + 1, c:c + H].set(b_hh[g * H:(g + 1) * H])

    fc1_w, fc1_b = params["fc1_w"], params["fc1_b"]      # (M, H+S), (M,)
    fc2_w, fc2_b = params["fc2_w"], params["fc2_b"]      # (L, M), (L,)
    slab = slab.at[r_fc1w:r_fc1w + H, 0:M].set(fc1_w[:, :H].T)
    slab = slab.at[r_fc1s:r_fc1s + S, 0:M].set(fc1_w[:, H:].T)
    slab = slab.at[r_fc1b, 0:M].set(fc1_b)
    slab = slab.at[r_fc2w:r_fc2w + M, 0:L].set(fc2_w.T)
    slab = slab.at[r_fc2b, 0:L].set(fc2_b)
    return slab


# ----------------------------------------------------------------------------
# Per-call wrapper: only input layout prep + one pallas_call.
# ----------------------------------------------------------------------------
def gru_forward(x_dynamic, x_static, slab, *, output_sequence_length):
    """x_dynamic: (B, T, D) f32 (batch_first), x_static: (B, S) f32,
       slab: packed params from prepare_params().
       Returns (B, output_sequence_length, 1)."""
    B, T, D = x_dynamic.shape
    S = x_static.shape[1]
    L = output_sequence_length
    Bp = _round8(B)
    Dp = _round8(max(D, 1))
    Sp = _round8(max(S, 1))

    # Time-major + batch/feature zero-pad so per-step tiles are whole sublanes.
    x_tm = jnp.transpose(x_dynamic, (1, 0, 2))                       # (T, B, D)
    x_tm = jnp.pad(x_tm, ((0, 0), (0, Bp - B), (0, Dp - D)))         # (T, Bp, Dp)
    x2d = x_tm.reshape(T * Bp, Dp).astype(jnp.float32)
    xs = jnp.pad(x_static, ((0, Bp - B), (0, Sp - S))).astype(jnp.float32)

    vmem = pl.BlockSpec(memory_space=pltpu.MemorySpace.VMEM)
    # TODO(synk): for large B on v7x, add a "parallel" batch grid axis to use
    # the second TensorCore; unnecessary at this tiny configuration.
    out = pl.pallas_call(
        _gru_mlp_kernel,
        out_shape=jax.ShapeDtypeStruct((Bp, LG), jnp.float32),
        in_specs=[vmem, vmem, vmem],
        out_specs=vmem,
        scratch_shapes=[pltpu.VMEM((T * Bp, 3 * LG), jnp.float32)],
    )(x2d, xs, slab)

    return out[:B, :L].reshape(B, L, -1)


# ----------------------------------------------------------------------------
# Pure-JAX reference (mirrors torch.nn.GRU + the Sequential head).
# ----------------------------------------------------------------------------
def gru_reference(x_dynamic, x_static, params, *, hidden_size, output_sequence_length):
    B, T, D = x_dynamic.shape
    H = hidden_size
    w_ih, w_hh = params["w_ih"], params["w_hh"]
    b_ih, b_hh = params["b_ih"], params["b_hh"]

    def step(h, x_t):
        gx = x_t @ w_ih.T + b_ih
        gh = h @ w_hh.T + b_hh
        r = jax.nn.sigmoid(gx[:, :H] + gh[:, :H])
        z = jax.nn.sigmoid(gx[:, H:2 * H] + gh[:, H:2 * H])
        n = jnp.tanh(gx[:, 2 * H:] + r * gh[:, 2 * H:])
        h_new = (1.0 - z) * n + z * h
        return h_new, h_new

    h0 = jnp.zeros((B, H), jnp.float32)
    h_last, _ = jax.lax.scan(step, h0, jnp.transpose(x_dynamic, (1, 0, 2)))

    combined = jnp.concatenate([h_last, x_static], axis=1)
    a1 = jnp.maximum(combined @ params["fc1_w"].T + params["fc1_b"], 0.0)
    y = a1 @ params["fc2_w"].T + params["fc2_b"]
    return y.reshape(B, output_sequence_length, -1)


def init_params(key, *, num_dynamic_feature, num_static_feature, gru_hidden_size,
                mlp_hidden_size, output_sequence_length):
    D, S, H = num_dynamic_feature, num_static_feature, gru_hidden_size
    M, L = mlp_hidden_size, output_sequence_length
    total_in = H + S
    keys = jax.random.split(key, 8)
    k = 1.0 / jnp.sqrt(H)
    u = lambda kk, shape, bound: jax.random.uniform(kk, shape, jnp.float32, -bound, bound)
    return {
        "w_ih": u(keys[0], (3 * H, D), k),
        "w_hh": u(keys[1], (3 * H, H), k),
        "b_ih": u(keys[2], (3 * H,), k),
        "b_hh": u(keys[3], (3 * H,), k),
        "fc1_w": u(keys[4], (M, total_in), 1.0 / jnp.sqrt(total_in)),
        "fc1_b": u(keys[5], (M,), 1.0 / jnp.sqrt(total_in)),
        "fc2_w": u(keys[6], (L, M), 1.0 / jnp.sqrt(M)),
        "fc2_b": u(keys[7], (L,), 1.0 / jnp.sqrt(M)),
    }


if __name__ == "__main__":
    # num_dynamic_feature=4, num_static_feature=3, gru_hidden_size=32,
    # mlp_hidden_size=[16] (ReLU), output_sequence_length=8, batch=4, seq=8.
    B, T, D = 4, 8, 4
    S, H, M, L = 3, 32, 16, 8

    key = jax.random.PRNGKey(0)
    k_x, k_s, k_p = jax.random.split(key, 3)
    x_dynamic = jax.random.normal(k_x, (B, T, D), jnp.float32)
    x_static = jax.random.normal(k_s, (B, S), jnp.float32)
    params = init_params(k_p, num_dynamic_feature=D, num_static_feature=S,
                         gru_hidden_size=H, mlp_hidden_size=M,
                         output_sequence_length=L)

    # Parameter packing happens ONCE, outside the per-call path.
    slab = jax.block_until_ready(
        prepare_params(params, num_dynamic_feature=D, num_static_feature=S,
                       gru_hidden_size=H, mlp_hidden_size=M,
                       output_sequence_length=L))

    run = functools.partial(gru_forward, output_sequence_length=L)
    y = jax.block_until_ready(jax.jit(run)(x_dynamic, x_static, slab))

    y_ref = gru_reference(x_dynamic, x_static, params,
                          hidden_size=H, output_sequence_length=L)

    assert y.shape == (B, L, 1), y.shape
    assert jnp.allclose(y, y_ref, atol=1e-4, rtol=1e-4), \
        f"max err {jnp.max(jnp.abs(y - y_ref))}"
    print("KERNEL_OK")
</pallas_src>

<mosaic_0001>
module attributes {stable_mosaic.version = 11 : i64} {
  func.func @_gru_mlp_kernel(%arg0: memref<64x8xf32, #tpu.memory_space<vmem>>, %arg1: memref<8x8xf32, #tpu.memory_space<vmem>>, %arg2: memref<424x384xf32, #tpu.memory_space<vmem>>, %arg3: memref<8x128xf32, #tpu.memory_space<vmem>>, %arg4: memref<64x384xf32, #tpu.memory_space<vmem>>) attributes {dimension_semantics = [], scalar_prefetch = 0 : i64, scratch_operands = 1 : i64, tpu.core_type = #tpu.core_type<tc>} {
    %c0 = arith.constant 0 : index
    %c0_0 = arith.constant 0 : index
    %0 = vector.load %arg0[%c0, %c0_0] : memref<64x8xf32, #tpu.memory_space<vmem>>, vector<64x8xf32>
    %c0_1 = arith.constant 0 : index
    %c0_2 = arith.constant 0 : index
    %1 = vector.load %arg2[%c0_1, %c0_2] : memref<424x384xf32, #tpu.memory_space<vmem>>, vector<8x384xf32>
    %cst = arith.constant dense<0.000000e+00> : vector<64x384xf32>
    %2 = tpu.matmul %0, %1, %cst {dimension_numbers = #tpu.dot_dimension_numbers<[1], [0], [0], [1], [0, 0, 1, 1], [], []>} : vector<64x8xf32>, vector<8x384xf32>, vector<64x384xf32> -> vector<64x384xf32>
    %c136 = arith.constant 136 : index
    %c0_3 = arith.constant 0 : index
    %3 = vector.load %arg2[%c136, %c0_3] : memref<424x384xf32, #tpu.memory_space<vmem>>, vector<1x384xf32>
    %4 = vector.broadcast %3 : vector<1x384xf32> to vector<64x384xf32>
    %5 = arith.addf %2, %4 : vector<64x384xf32>
    %c0_4 = arith.constant 0 : index
    %c0_5 = arith.constant 0 : index
    %6 = vector.load %arg4[%c0_4, %c0_5] : memref<64x384xf32, #tpu.memory_space<vmem>>, vector<64x384xf32>
    tpu.vector_store %arg4[%c0_4, %c0_5], %5 {strides = array<i32>} : memref<64x384xf32, #tpu.memory_space<vmem>>, vector<64x384xf32>,
    %cst_6 = arith.constant 0.000000e+00 : f32
    %7 = vector.broadcast %cst_6 : f32 to vector<8x128xf32>
    %c0_7 = arith.constant 0 : index
    %c0_8 = arith.constant 0 : index
    %8 = vector.load %arg4[%c0_7, %c0_8] : memref<64x384xf32, #tpu.memory_space<vmem>>, vector<8x384xf32>
    %c8 = arith.constant 8 : index
    %c0_9 = arith.constant 0 : index
    %9 = vector.load %arg2[%c8, %c0_9] : memref<424x384xf32, #tpu.memory_space<vmem>>, vector<128x384xf32>
    %cst_10 = arith.constant dense<0.000000e+00> : vector<8x384xf32>
    %10 = tpu.matmul %7, %9, %cst_10 {dimension_numbers = #tpu.dot_dimension_numbers<[1], [0], [0], [1], [0, 0, 1, 1], [], []>} : vector<8x128xf32>, vector<128x384xf32>, vector<8x384xf32> -> vector<8x384xf32>
    %c137 = arith.constant 137 : index
    %c0_11 = arith.constant 0 : index
    %11 = vector.load %arg2[%c137, %c0_11] : memref<424x384xf32, #tpu.memory_space<vmem>>, vector<1x384xf32>
    %12 = vector.broadcast %11 : vector<1x384xf32> to vector<8x384xf32>
    %13 = arith.addf %10, %12 : vector<8x384xf32>
    %14 = vector.extract_strided_slice %8 {offsets = [0, 0], sizes = [8, 256], strides = [1, 1]} : vector<8x384xf32> to vector<8x256xf32>
    %15 = vector.extract_strided_slice %13 {offsets = [0, 0], sizes = [8, 256], strides = [1, 1]} : vector<8x384xf32> to vector<8x256xf32>
    %16 = arith.addf %14, %15 : vector<8x256xf32>
    %cst_12 = arith.constant 5.000000e-01 : f32
    %17 = vector.broadcast %cst_12 : f32 to vector<8x256xf32>
    %18 = arith.mulf %17, %16 : vector<8x256xf32>
    %19 = math.tanh %18 : vector<8x256xf32>
    %cst_13 = arith.constant 1.000000e+00 : f32
    %20 = vector.broadcast %cst_13 : f32 to vector<8x256xf32>
    %21 = arith.addf %19, %20 : vector<8x256xf32>
    %cst_14 = arith.constant 5.000000e-01 : f32
    %22 = vector.broadcast %cst_14 : f32 to vector<8x256xf32>
    %23 = arith.mulf %22, %21 : vector<8x256xf32>
    %24 = vector.extract_strided_slice %23 {offsets = [0, 0], sizes = [8, 128], strides = [1, 1]} : vector<8x256xf32> to vector<8x128xf32>
    %25 = vector.extract_strided_slice %23 {offsets = [0, 128], sizes = [8, 128], strides = [1, 1]} : vector<8x256xf32> to vector<8x128xf32>
    %26 = vector.extract_strided_slice %8 {offsets = [0, 256], sizes = [8, 128], strides = [1, 1]} : vector<8x384xf32> to vector<8x128xf32>
    %27 = vector.extract_strided_slice %13 {offsets = [0, 256], sizes = [8, 128], strides = [1, 1]} : vector<8x384xf32> to vector<8x128xf32>
    %28 = arith.mulf %24, %27 : vector<8x128xf32>
    %29 = arith.addf %26, %28 : vector<8x128xf32>
    %30 = math.tanh %29 : vector<8x128xf32>
    %cst_15 = arith.constant 1.000000e+00 : f32
    %31 = vector.broadcast %cst_15 : f32 to vector<8x128xf32>
    %32 = arith.subf %31, %25 : vector<8x128xf32>
    %33 = arith.mulf %32, %30 : vector<8x128xf32>
    %34 = arith.mulf %25, %7 : vector<8x128xf32>
    %35 = arith.addf %33, %34 : vector<8x128xf32>
    %c8_16 = arith.constant 8 : index
    %c0_17 = arith.constant 0 : index
    %36 = vector.load %arg4[%c8_16, %c0_17] : memref<64x384xf32, #tpu.memory_space<vmem>>, vector<8x384xf32>
    %c8_18 = arith.constant 8 : index
    %c0_19 = arith.constant 0 : index
    %37 = vector.load %arg2[%c8_18, %c0_19] : memref<424x384xf32, #tpu.memory_space<vmem>>, vector<128x384xf32>
    %cst_20 = arith.constant dense<0.000000e+00> : vector<8x384xf32>
    %38 = tpu.matmul %35, %37, %cst_20 {dimension_numbers = #tpu.dot_dimension_numbers<[1], [0], [0], [1], [0, 0, 1, 1], [], []>} : vector<8x128xf32>, vector<128x384xf32>, vector<8x384xf32> -> vector<8x384xf32>
    %c137_21 = arith.constant 137 : index
    %c0_22 = arith.constant 0 : index
    %39 = vector.load %arg2[%c137_21, %c0_22] : memref<424x384xf32, #tpu.memory_space<vmem>>, vector<1x384xf32>
    %40 = vector.broadcast %39 : vector<1x384xf32> to vector<8x384xf32>
    %41 = arith.addf %38, %40 : vector<8x384xf32>
    %42 = vector.extract_strided_slice %36 {offsets = [0, 0], sizes = [8, 256], strides = [1, 1]} : vector<8x384xf32> to vector<8x256xf32>
    %43 = vector.extract_strided_slice %41 {offsets = [0, 0], sizes = [8, 256], strides = [1, 1]} : vector<8x384xf32> to vector<8x256xf32>
    %44 = arith.addf %42, %43 : vector<8x256xf32>
    %cst_23 = arith.constant 5.000000e-01 : f32
    %45 = vector.broadcast %cst_23 : f32 to vector<8x256xf32>
    %46 = arith.mulf %45, %44 : vector<8x256xf32>
    %47 = math.tanh %46 : vector<8x256xf32>
    %cst_24 = arith.constant 1.000000e+00 : f32
    %48 = vector.broadcast %cst_24 : f32 to vector<8x256xf32>
    %49 = arith.addf %47, %48 : vector<8x256xf32>
    %cst_25 = arith.constant 5.000000e-01 : f32
    %50 = vector.broadcast %cst_25 : f32 to vector<8x256xf32>
    %51 = arith.mulf %50, %49 : vector<8x256xf32>
    %52 = vector.extract_strided_slice %51 {offsets = [0, 0], sizes = [8, 128], strides = [1, 1]} : vector<8x256xf32> to vector<8x128xf32>
    %53 = vector.extract_strided_slice %51 {offsets = [0, 128], sizes = [8, 128], strides = [1, 1]} : vector<8x256xf32> to vector<8x128xf32>
    %54 = vector.extract_strided_slice %36 {offsets = [0, 256], sizes = [8, 128], strides = [1, 1]} : vector<8x384xf32> to vector<8x128xf32>
    %55 = vector.extract_strided_slice %41 {offsets = [0, 256], sizes = [8, 128], strides = [1, 1]} : vector<8x384xf32> to vector<8x128xf32>
    %56 = arith.mulf %52, %55 : vector<8x128xf32>
    %57 = arith.addf %54, %56 : vector<8x128xf32>
    %58 = math.tanh %57 : vector<8x128xf32>
    %cst_26 = arith.constant 1.000000e+00 : f32
    %59 = vector.broadcast %cst_26 : f32 to vector<8x128xf32>
    %60 = arith.subf %59, %53 : vector<8x128xf32>
    %61 = arith.mulf %60, %58 : vector<8x128xf32>
    %62 = arith.mulf %53, %35 : vector<8x128xf32>
    %63 = arith.addf %61, %62 : vector<8x128xf32>
    %c16 = arith.constant 16 : index
    %c0_27 = arith.constant 0 : index
    %64 = vector.load %arg4[%c16, %c0_27] : memref<64x384xf32, #tpu.memory_space<vmem>>, vector<8x384xf32>
    %c8_28 = arith.constant 8 : index
    %c0_29 = arith.constant 0 : index
    %65 = vector.load %arg2[%c8_28, %c0_29] : memref<424x384xf32, #tpu.memory_space<vmem>>, vector<128x384xf32>
    %cst_30 = arith.constant dense<0.000000e+00> : vector<8x384xf32>
    %66 = tpu.matmul %63, %65, %cst_30 {dimension_numbers = #tpu.dot_dimension_numbers<[1], [0], [0], [1], [0, 0, 1, 1], [], []>} : vector<8x128xf32>, vector<128x384xf32>, vector<8x384xf32> -> vector<8x384xf32>
    %c137_31 = arith.constant 137 : index
    %c0_32 = arith.constant 0 : index
    %67 = vector.load %arg2[%c137_31, %c0_32] : memref<424x384xf32, #tpu.memory_space<vmem>>, vector<1x384xf32>
    %68 = vector.broadcast %67 : vector<1x384xf32> to vector<8x384xf32>
    %69 = arith.addf %66, %68 : vector<8x384xf32>
    %70 = vector.extract_strided_slice %64 {offsets = [0, 0], sizes = [8, 256], strides = [1, 1]} : vector<8x384xf32> to vector<8x256xf32>
    %71 = vector.extract_strided_slice %69 {offsets = [0, 0], sizes = [8, 256], strides = [1, 1]} : vector<8x384xf32> to vector<8x256xf32>
    %72 = arith.addf %70, %71 : vector<8x256xf32>
    %cst_33 = arith.constant 5.000000e-01 : f32
    %73 = vector.broadcast %cst_33 : f32 to vector<8x256xf32>
    %74 = arith.mulf %73, %72 : vector<8x256xf32>
    %75 = math.tanh %74 : vector<8x256xf32>
    %cst_34 = arith.constant 1.000000e+00 : f32
    %76 = vector.broadcast %cst_34 : f32 to vector<8x256xf32>
    %77 = arith.addf %75, %76 : vector<8x256xf32>
    %cst_35 = arith.constant 5.000000e-01 : f32
    %78 = vector.broadcast %cst_35 : f32 to vector<8x256xf32>
    %79 = arith.mulf %78, %77 : vector<8x256xf32>
    %80 = vector.extract_strided_slice %79 {offsets = [0, 0], sizes = [8, 128], strides = [1, 1]} : vector<8x256xf32> to vector<8x128xf32>
    %81 = vector.extract_strided_slice %79 {offsets = [0, 128], sizes = [8, 128], strides = [1, 1]} : vector<8x256xf32> to vector<8x128xf32>
    %82 = vector.extract_strided_slice %64 {offsets = [0, 256], sizes = [8, 128], strides = [1, 1]} : vector<8x384xf32> to vector<8x128xf32>
    %83 = vector.extract_strided_slice %69 {offsets = [0, 256], sizes = [8, 128], strides = [1, 1]} : vector<8x384xf32> to vector<8x128xf32>
    %84 = arith.mulf %80, %83 : vector<8x128xf32>
    %85 = arith.addf %82, %84 : vector<8x128xf32>
    %86 = math.tanh %85 : vector<8x128xf32>
    %cst_36 = arith.constant 1.000000e+00 : f32
    %87 = vector.broadcast %cst_36 : f32 to vector<8x128xf32>
    %88 = arith.subf %87, %81 : vector<8x128xf32>
    %89 = arith.mulf %88, %86 : vector<8x128xf32>
    %90 = arith.mulf %81, %63 : vector<8x128xf32>
    %91 = arith.addf %89, %90 : vector<8x128xf32>
    %c24 = arith.constant 24 : index
    %c0_37 = arith.constant 0 : index
    %92 = vector.load %arg4[%c24, %c0_37] : memref<64x384xf32, #tpu.memory_space<vmem>>, vector<8x384xf32>
    %c8_38 = arith.constant 8 : index
    %c0_39 = arith.constant 0 : index
    %93 = vector.load %arg2[%c8_38, %c0_39] : memref<424x384xf32, #tpu.memory_space<vmem>>, vector<128x384xf32>
    %cst_40 = arith.constant dense<0.000000e+00> : vector<8x384xf32>
    %94 = tpu.matmul %91, %93, %cst_40 {dimension_numbers = #tpu.dot_dimension_numbers<[1], [0], [0], [1], [0, 0, 1, 1], [], []>} : vector<8x128xf32>, vector<128x384xf32>, vector<8x384xf32> -> vector<8x384xf32>
    %c137_41 = arith.constant 137 : index
    %c0_42 = arith.constant 0 : index
    %95 = vector.load %arg2[%c137_41, %c0_42] : memref<424x384xf32, #tpu.memory_space<vmem>>, vector<1x384xf32>
    %96 = vector.broadcast %95 : vector<1x384xf32> to vector<8x384xf32>
    %97 = arith.addf %94, %96 : vector<8x384xf32>
    %98 = vector.extract_strided_slice %92 {offsets = [0, 0], sizes = [8, 256], strides = [1, 1]} : vector<8x384xf32> to vector<8x256xf32>
    %99 = vector.extract_strided_slice %97 {offsets = [0, 0], sizes = [8, 256], strides = [1, 1]} : vector<8x384xf32> to vector<8x256xf32>
    %100 = arith.addf %98, %99 : vector<8x256xf32>
    %cst_43 = arith.constant 5.000000e-01 : f32
    %101 = vector.broadcast %cst_43 : f32 to vector<8x256xf32>
    %102 = arith.mulf %101, %100 : vector<8x256xf32>
    %103 = math.tanh %102 : vector<8x256xf32>
    %cst_44 = arith.constant 1.000000e+00 : f32
    %104 = vector.broadcast %cst_44 : f32 to vector<8x256xf32>
    %105 = arith.addf %103, %104 : vector<8x256xf32>
    %cst_45 = arith.constant 5.000000e-01 : f32
    %106 = vector.broadcast %cst_45 : f32 to vector<8x256xf32>
    %107 = arith.mulf %106, %105 : vector<8x256xf32>
    %108 = vector.extract_strided_slice %107 {offsets = [0, 0], sizes = [8, 128], strides = [1, 1]} : vector<8x256xf32> to vector<8x128xf32>
    %109 = vector.extract_strided_slice %107 {offsets = [0, 128], sizes = [8, 128], strides = [1, 1]} : vector<8x256xf32> to vector<8x128xf32>
    %110 = vector.extract_strided_slice %92 {offsets = [0, 256], sizes = [8, 128], strides = [1, 1]} : vector<8x384xf32> to vector<8x128xf32>
    %111 = vector.extract_strided_slice %97 {offsets = [0, 256], sizes = [8, 128], strides = [1, 1]} : vector<8x384xf32> to vector<8x128xf32>
    %112 = arith.mulf %108, %111 : vector<8x128xf32>
    %113 = arith.addf %110, %112 : vector<8x128xf32>
    %114 = math.tanh %113 : vector<8x128xf32>
    %cst_46 = arith.constant 1.000000e+00 : f32
    %115 = vector.broadcast %cst_46 : f32 to vector<8x128xf32>
    %116 = arith.subf %115, %109 : vector<8x128xf32>
    %117 = arith.mulf %116, %114 : vector<8x128xf32>
    %118 = arith.mulf %109, %91 : vector<8x128xf32>
    %119 = arith.addf %117, %118 : vector<8x128xf32>
    %c32 = arith.constant 32 : index
    %c0_47 = arith.constant 0 : index
    %120 = vector.load %arg4[%c32, %c0_47] : memref<64x384xf32, #tpu.memory_space<vmem>>, vector<8x384xf32>
    %c8_48 = arith.constant 8 : index
    %c0_49 = arith.constant 0 : index
    %121 = vector.load %arg2[%c8_48, %c0_49] : memref<424x384xf32, #tpu.memory_space<vmem>>, vector<128x384xf32>
    %cst_50 = arith.constant dense<0.000000e+00> : vector<8x384xf32>
    %122 = tpu.matmul %119, %121, %cst_50 {dimension_numbers = #tpu.dot_dimension_numbers<[1], [0], [0], [1], [0, 0, 1, 1], [], []>} : vector<8x128xf32>, vector<128x384xf32>, vector<8x384xf32> -> vector<8x384xf32>
    %c137_51 = arith.constant 137 : index
    %c0_52 = arith.constant 0 : index
    %123 = vector.load %arg2[%c137_51, %c0_52] : memref<424x384xf32, #tpu.memory_space<vmem>>, vector<1x384xf32>
    %124 = vector.broadcast %123 : vector<1x384xf32> to vector<8x384xf32>
    %125 = arith.addf %122, %124 : vector<8x384xf32>
    %126 = vector.extract_strided_slice %120 {offsets = [0, 0], sizes = [8, 256], strides = [1, 1]} : vector<8x384xf32> to vector<8x256xf32>
    %127 = vector.extract_strided_slice %125 {offsets = [0, 0], sizes = [8, 256], strides = [1, 1]} : vector<8x384xf32> to vector<8x256xf32>
    %128 = arith.addf %126, %127 : vector<8x256xf32>
    %cst_53 = arith.constant 5.000000e-01 : f32
    %129 = vector.broadcast %cst_53 : f32 to vector<8x256xf32>
    %130 = arith.mulf %129, %128 : vector<8x256xf32>
    %131 = math.tanh %130 : vector<8x256xf32>
    %cst_54 = arith.constant 1.000000e+00 : f32
    %132 = vector.broadcast %cst_54 : f32 to vector<8x256xf32>
    %133 = arith.addf %131, %132 : vector<8x256xf32>
    %cst_55 = arith.constant 5.000000e-01 : f32
    %134 = vector.broadcast %cst_55 : f32 to vector<8x256xf32>
    %135 = arith.mulf %134, %133 : vector<8x256xf32>
    %136 = vector.extract_strided_slice %135 {offsets = [0, 0], sizes = [8, 128], strides = [1, 1]} : vector<8x256xf32> to vector<8x128xf32>
    %137 = vector.extract_strided_slice %135 {offsets = [0, 128], sizes = [8, 128], strides = [1, 1]} : vector<8x256xf32> to vector<8x128xf32>
    %138 = vector.extract_strided_slice %120 {offsets = [0, 256], sizes = [8, 128], strides = [1, 1]} : vector<8x384xf32> to vector<8x128xf32>
    %139 = vector.extract_strided_slice %125 {offsets = [0, 256], sizes = [8, 128], strides = [1, 1]} : vector<8x384xf32> to vector<8x128xf32>
    %140 = arith.mulf %136, %139 : vector<8x128xf32>
    %141 = arith.addf %138, %140 : vector<8x128xf32>
    %142 = math.tanh %141 : vector<8x128xf32>
    %cst_56 = arith.constant 1.000000e+00 : f32
    %143 = vector.broadcast %cst_56 : f32 to vector<8x128xf32>
    %144 = arith.subf %143, %137 : vector<8x128xf32>
    %145 = arith.mulf %144, %142 : vector<8x128xf32>
    %146 = arith.mulf %137, %119 : vector<8x128xf32>
    %147 = arith.addf %145, %146 : vector<8x128xf32>
    %c40 = arith.constant 40 : index
    %c0_57 = arith.constant 0 : index
    %148 = vector.load %arg4[%c40, %c0_57] : memref<64x384xf32, #tpu.memory_space<vmem>>, vector<8x384xf32>
    %c8_58 = arith.constant 8 : index
    %c0_59 = arith.constant 0 : index
    %149 = vector.load %arg2[%c8_58, %c0_59] : memref<424x384xf32, #tpu.memory_space<vmem>>, vector<128x384xf32>
    %cst_60 = arith.constant dense<0.000000e+00> : vector<8x384xf32>
    %150 = tpu.matmul %147, %149, %cst_60 {dimension_numbers = #tpu.dot_dimension_numbers<[1], [0], [0], [1], [0, 0, 1, 1], [], []>} : vector<8x128xf32>, vector<128x384xf32>, vector<8x384xf32> -> vector<8x384xf32>
    %c137_61 = arith.constant 137 : index
    %c0_62 = arith.constant 0 : index
    %151 = vector.load %arg2[%c137_61, %c0_62] : memref<424x384xf32, #tpu.memory_space<vmem>>, vector<1x384xf32>
    %152 = vector.broadcast %151 : vector<1x384xf32> to vector<8x384xf32>
    %153 = arith.addf %150, %152 : vector<8x384xf32>
    %154 = vector.extract_strided_slice %148 {offsets = [0, 0], sizes = [8, 256], strides = [1, 1]} : vector<8x384xf32> to vector<8x256xf32>
    %155 = vector.extract_strided_slice %153 {offsets = [0, 0], sizes = [8, 256], strides = [1, 1]} : vector<8x384xf32> to vector<8x256xf32>
    %156 = arith.addf %154, %155 : vector<8x256xf32>
    %cst_63 = arith.constant 5.000000e-01 : f32
    %157 = vector.broadcast %cst_63 : f32 to vector<8x256xf32>
    %158 = arith.mulf %157, %156 : vector<8x256xf32>
    %159 = math.tanh %158 : vector<8x256xf32>
    %cst_64 = arith.constant 1.000000e+00 : f32
    %160 = vector.broadcast %cst_64 : f32 to vector<8x256xf32>
    %161 = arith.addf %159, %160 : vector<8x256xf32>
    %cst_65 = arith.constant 5.000000e-01 : f32
    %162 = vector.broadcast %cst_65 : f32 to vector<8x256xf32>
    %163 = arith.mulf %162, %161 : vector<8x256xf32>
    %164 = vector.extract_strided_slice %163 {offsets = [0, 0], sizes = [8, 128], strides = [1, 1]} : vector<8x256xf32> to vector<8x128xf32>
    %165 = vector.extract_strided_slice %163 {offsets = [0, 128], sizes = [8, 128], strides = [1, 1]} : vector<8x256xf32> to vector<8x128xf32>
    %166 = vector.extract_strided_slice %148 {offsets = [0, 256], sizes = [8, 128], strides = [1, 1]} : vector<8x384xf32> to vector<8x128xf32>
    %167 = vector.extract_strided_slice %153 {offsets = [0, 256], sizes = [8, 128], strides = [1, 1]} : vector<8x384xf32> to vector<8x128xf32>
    %168 = arith.mulf %164, %167 : vector<8x128xf32>
    %169 = arith.addf %166, %168 : vector<8x128xf32>
    %170 = math.tanh %169 : vector<8x128xf32>
    %cst_66 = arith.constant 1.000000e+00 : f32
    %171 = vector.broadcast %cst_66 : f32 to vector<8x128xf32>
    %172 = arith.subf %171, %165 : vector<8x128xf32>
    %173 = arith.mulf %172, %170 : vector<8x128xf32>
    %174 = arith.mulf %165, %147 : vector<8x128xf32>
    %175 = arith.addf %173, %174 : vector<8x128xf32>
    %c48 = arith.constant 48 : index
    %c0_67 = arith.constant 0 : index
    %176 = vector.load %arg4[%c48, %c0_67] : memref<64x384xf32, #tpu.memory_space<vmem>>, vector<8x384xf32>
    %c8_68 = arith.constant 8 : index
    %c0_69 = arith.constant 0 : index
    %177 = vector.load %arg2[%c8_68, %c0_69] : memref<424x384xf32, #tpu.memory_space<vmem>>, vector<128x384xf32>
    %cst_70 = arith.constant dense<0.000000e+00> : vector<8x384xf32>
    %178 = tpu.matmul %175, %177, %cst_70 {dimension_numbers = #tpu.dot_dimension_numbers<[1], [0], [0], [1], [0, 0, 1, 1], [], []>} : vector<8x128xf32>, vector<128x384xf32>, vector<8x384xf32> -> vector<8x384xf32>
    %c137_71 = arith.constant 137 : index
    %c0_72 = arith.constant 0 : index
    %179 = vector.load %arg2[%c137_71, %c0_72] : memref<424x384xf32, #tpu.memory_space<vmem>>, vector<1x384xf32>
    %180 = vector.broadcast %179 : vector<1x384xf32> to vector<8x384xf32>
    %181 = arith.addf %178, %180 : vector<8x384xf32>
    %182 = vector.extract_strided_slice %176 {offsets = [0, 0], sizes = [8, 256], strides = [1, 1]} : vector<8x384xf32> to vector<8x256xf32>
    %183 = vector.extract_strided_slice %181 {offsets = [0, 0], sizes = [8, 256], strides = [1, 1]} : vector<8x384xf32> to vector<8x256xf32>
    %184 = arith.addf %182, %183 : vector<8x256xf32>
    %cst_73 = arith.constant 5.000000e-01 : f32
    %185 = vector.broadcast %cst_73 : f32 to vector<8x256xf32>
    %186 = arith.mulf %185, %184 : vector<8x256xf32>
    %187 = math.tanh %186 : vector<8x256xf32>
    %cst_74 = arith.constant 1.000000e+00 : f32
    %188 = vector.broadcast %cst_74 : f32 to vector<8x256xf32>
    %189 = arith.addf %187, %188 : vector<8x256xf32>
    %cst_75 = arith.constant 5.000000e-01 : f32
    %190 = vector.broadcast %cst_75 : f32 to vector<8x256xf32>
    %191 = arith.mulf %190, %189 : vector<8x256xf32>
    %192 = vector.extract_strided_slice %191 {offsets = [0, 0], sizes = [8, 128], strides = [1, 1]} : vector<8x256xf32> to vector<8x128xf32>
    %193 = vector.extract_strided_slice %191 {offsets = [0, 128], sizes = [8, 128], strides = [1, 1]} : vector<8x256xf32> to vector<8x128xf32>
    %194 = vector.extract_strided_slice %176 {offsets = [0, 256], sizes = [8, 128], strides = [1, 1]} : vector<8x384xf32> to vector<8x128xf32>
    %195 = vector.extract_strided_slice %181 {offsets = [0, 256], sizes = [8, 128], strides = [1, 1]} : vector<8x384xf32> to vector<8x128xf32>
    %196 = arith.mulf %192, %195 : vector<8x128xf32>
    %197 = arith.addf %194, %196 : vector<8x128xf32>
    %198 = math.tanh %197 : vector<8x128xf32>
    %cst_76 = arith.constant 1.000000e+00 : f32
    %199 = vector.broadcast %cst_76 : f32 to vector<8x128xf32>
    %200 = arith.subf %199, %193 : vector<8x128xf32>
    %201 = arith.mulf %200, %198 : vector<8x128xf32>
    %202 = arith.mulf %193, %175 : vector<8x128xf32>
    %203 = arith.addf %201, %202 : vector<8x128xf32>
    %c56 = arith.constant 56 : index
    %c0_77 = arith.constant 0 : index
    %204 = vector.load %arg4[%c56, %c0_77] : memref<64x384xf32, #tpu.memory_space<vmem>>, vector<8x384xf32>
    %c8_78 = arith.constant 8 : index
    %c0_79 = arith.constant 0 : index
    %205 = vector.load %arg2[%c8_78, %c0_79] : memref<424x384xf32, #tpu.memory_space<vmem>>, vector<128x384xf32>
    %cst_80 = arith.constant dense<0.000000e+00> : vector<8x384xf32>
    %206 = tpu.matmul %203, %205, %cst_80 {dimension_numbers = #tpu.dot_dimension_numbers<[1], [0], [0], [1], [0, 0, 1, 1], [], []>} : vector<8x128xf32>, vector<128x384xf32>, vector<8x384xf32> -> vector<8x384xf32>
    %c137_81 = arith.constant 137 : index
    %c0_82 = arith.constant 0 : index
    %207 = vector.load %arg2[%c137_81, %c0_82] : memref<424x384xf32, #tpu.memory_space<vmem>>, vector<1x384xf32>
    %208 = vector.broadcast %207 : vector<1x384xf32> to vector<8x384xf32>
    %209 = arith.addf %206, %208 : vector<8x384xf32>
    %210 = vector.extract_strided_slice %204 {offsets = [0, 0], sizes = [8, 256], strides = [1, 1]} : vector<8x384xf32> to vector<8x256xf32>
    %211 = vector.extract_strided_slice %209 {offsets = [0, 0], sizes = [8, 256], strides = [1, 1]} : vector<8x384xf32> to vector<8x256xf32>
    %212 = arith.addf %210, %211 : vector<8x256xf32>
    %cst_83 = arith.constant 5.000000e-01 : f32
    %213 = vector.broadcast %cst_83 : f32 to vector<8x256xf32>
    %214 = arith.mulf %213, %212 : vector<8x256xf32>
    %215 = math.tanh %214 : vector<8x256xf32>
    %cst_84 = arith.constant 1.000000e+00 : f32
    %216 = vector.broadcast %cst_84 : f32 to vector<8x256xf32>
    %217 = arith.addf %215, %216 : vector<8x256xf32>
    %cst_85 = arith.constant 5.000000e-01 : f32
    %218 = vector.broadcast %cst_85 : f32 to vector<8x256xf32>
    %219 = arith.mulf %218, %217 : vector<8x256xf32>
    %220 = vector.extract_strided_slice %219 {offsets = [0, 0], sizes = [8, 128], strides = [1, 1]} : vector<8x256xf32> to vector<8x128xf32>
    %221 = vector.extract_strided_slice %219 {offsets = [0, 128], sizes = [8, 128], strides = [1, 1]} : vector<8x256xf32> to vector<8x128xf32>
    %222 = vector.extract_strided_slice %204 {offsets = [0, 256], sizes = [8, 128], strides = [1, 1]} : vector<8x384xf32> to vector<8x128xf32>
    %223 = vector.extract_strided_slice %209 {offsets = [0, 256], sizes = [8, 128], strides = [1, 1]} : vector<8x384xf32> to vector<8x128xf32>
    %224 = arith.mulf %220, %223 : vector<8x128xf32>
    %225 = arith.addf %222, %224 : vector<8x128xf32>
    %226 = math.tanh %225 : vector<8x128xf32>
    %cst_86 = arith.constant 1.000000e+00 : f32
    %227 = vector.broadcast %cst_86 : f32 to vector<8x128xf32>
    %228 = arith.subf %227, %221 : vector<8x128xf32>
    %229 = arith.mulf %228, %226 : vector<8x128xf32>
    %230 = arith.mulf %221, %203 : vector<8x128xf32>
    %231 = arith.addf %229, %230 : vector<8x128xf32>
    %c144 = arith.constant 144 : index
    %c0_87 = arith.constant 0 : index
    %232 = vector.load %arg2[%c144, %c0_87] : memref<424x384xf32, #tpu.memory_space<vmem>>, vector<128x128xf32>
    %cst_88 = arith.constant dense<0.000000e+00> : vector<8x128xf32>
    %233 = tpu.matmul %231, %232, %cst_88 {dimension_numbers = #tpu.dot_dimension_numbers<[1], [0], [0], [1], [0, 0, 1, 1], [], []>} : vector<8x128xf32>, vector<128x128xf32>, vector<8x128xf32> -> vector<8x128xf32>
    %c0_89 = arith.constant 0 : index
    %c0_90 = arith.constant 0 : index
    %234 = vector.load %arg1[%c0_89, %c0_90] : memref<8x8xf32, #tpu.memory_space<vmem>>, vector<8x8xf32>
    %c272 = arith.constant 272 : index
    %c0_91 = arith.constant 0 : index
    %235 = vector.load %arg2[%c272, %c0_91] : memref<424x384xf32, #tpu.memory_space<vmem>>, vector<8x128xf32>
    %cst_92 = arith.constant dense<0.000000e+00> : vector<8x128xf32>
    %236 = tpu.matmul %234, %235, %cst_92 {dimension_numbers = #tpu.dot_dimension_numbers<[1], [0], [0], [1], [0, 0, 1, 1], [], []>} : vector<8x8xf32>, vector<8x128xf32>, vector<8x128xf32> -> vector<8x128xf32>
    %237 = arith.addf %233, %236 : vector<8x128xf32>
    %c280 = arith.constant 280 : index
    %c0_93 = arith.constant 0 : index
    %238 = vector.load %arg2[%c280, %c0_93] : memref<424x384xf32, #tpu.memory_space<vmem>>, vector<1x128xf32>
    %239 = vector.broadcast %238 : vector<1x128xf32> to vector<8x128xf32>
    %240 = arith.addf %237, %239 : vector<8x128xf32>
    %cst_94 = arith.constant 0.000000e+00 : f32
    %241 = vector.broadcast %cst_94 : f32 to vector<8x128xf32>
    %242 = arith.maximumf %240, %241 : vector<8x128xf32>
    %c288 = arith.constant 288 : index
    %c0_95 = arith.constant 0 : index
    %243 = vector.load %arg2[%c288, %c0_95] : memref<424x384xf32, #tpu.memory_space<vmem>>, vector<128x128xf32>
    %cst_96 = arith.constant dense<0.000000e+00> : vector<8x128xf32>
    %244 = tpu.matmul %242, %243, %cst_96 {dimension_numbers = #tpu.dot_dimension_numbers<[1], [0], [0], [1], [0, 0, 1, 1], [], []>} : vector<8x128xf32>, vector<128x128xf32>, vector<8x128xf32> -> vector<8x128xf32>
    %c416 = arith.constant 416 : index
    %c0_97 = arith.constant 0 : index
    %245 = vector.load %arg2[%c416, %c0_97] : memref<424x384xf32, #tpu.memory_space<vmem>>, vector<1x128xf32>
    %246 = vector.broadcast %245 : vector<1x128xf32> to vector<8x128xf32>
    %247 = arith.addf %244, %246 : vector<8x128xf32>
    %c0_98 = arith.constant 0 : index
    %c0_99 = arith.constant 0 : index
    %248 = vector.load %arg3[%c0_98, %c0_99] : memref<8x128xf32, #tpu.memory_space<vmem>>, vector<8x128xf32>
    tpu.vector_store %arg3[%c0_98, %c0_99], %247 {strides = array<i32>} : memref<8x128xf32, #tpu.memory_space<vmem>>, vector<8x128xf32>,
    return
  }
}

</mosaic_0001>

<llo_original>
// kernel: gru_forward.1
$region0: #{gru_forward.1}
  #allocation0 [shape = 'u32[]', space=smem, size = 0x4, offset = 0x4, fixed_abs, tag = 'smem constant byte address 0x4 - core index']
  #allocation1 [shape = 'u32[72,128]{1,0:T(1,128)}', space=vmem, size = 0x9000, scoped, tag = 'internal scratch']
  #allocation2 [shape = 'f32[64,384]{1,0:T(8,128)}', space=vmem, size = 0x18000, scoped, tag = 'scratch operand']
  %s0 = inlined_call_operand.vmem [shape: f32[64,8], index: 0, kind: input, shape index: {}]
  %s1 = inlined_call_operand.vmem [shape: f32[8,8], index: 1, kind: input, shape index: {}]
  %s2 = inlined_call_operand.hbm [shape: f32[424,384], index: 2, kind: input, shape index: {}]
  %s3 = inlined_call_operand.vmem [shape: f32[8,128], index: 3, kind: output, shape index: {}]
  %s4 = sld [smem:[#allocation0]]
  $region26: #{gru_forward.1} parent=0
    _
  %s6 = ssub.s32 1, %s4
  %s7 = scalar_select 0, %s6, %s4
  $region1: #{gru_forward.1} parent=0
    #allocation3 [shape = 'u8[651264]{0}', space=vmem, size = 0x9f000, scoped, tag = 'input window, operand 2, single buffered']
    #allocation4 [shape = 's32[1]{0}', space=sflag, size = 0x4, scoped, tag = 'scoped memory for gru_forward.1']
    %8 = vsyncpa [#allocation4], 0
    // Predicated region
    $region2: #{gru_forward.1} parent=1 // pred_check
      _
    $region3: #{gru_forward.1} parent=1 // pred_check_branch
      %10 = sbr.rel (0) target = $region5
    $region4: #{gru_forward.1} parent=1 // pred_region
      _
    $region5: #{gru_forward.1} parent=1 // pred_fallthru
      _
    // Predicated region
    $region6: #{gru_forward.1} parent=1 // pred_check
      _
    $region7: #{gru_forward.1} parent=1 // pred_check_branch
      %12 = sbr.rel (0) target = $region9
    $region8: #{gru_forward.1} parent=1 // pred_region
      _
    $region9: #{gru_forward.1} parent=1 // pred_fallthru
      _
    // Predicated region
    $region10: #{gru_forward.1} parent=1 // pred_check
      _
    $region11: #{gru_forward.1} parent=1 // pred_check_branch
      %14 = sbr.rel (0) target = $region13
    $region12: #{gru_forward.1} parent=1 // pred_region
      %16 = vsyncadd [#allocation4], 0
      %s17 = sshll.u32 %s2, 4
      %s18 = int_to_ptr.hbm [resolvable:$true] %s17
      %s19 = sshll.u32 [#allocation3], 4
      %s20 = int_to_ptr.vmem [resolvable:$true] %s19
      %25 = dma.hbm_to_vmem [thread:$0]  %s18, 20352, %s20, [#allocation4], 384, 384, 24
    $region13: #{gru_forward.1} parent=1 // pred_fallthru
      _
    // Predicated region
    $region14: #{gru_forward.1} parent=1 // pred_check
      _
    $region15: #{gru_forward.1} parent=1 // pred_check_branch
      %27 = sbr.rel (0) target = $region17
    $region16: #{gru_forward.1} parent=1 // pred_region
      %29 = dma.done [#allocation4], 20352
    $region17: #{gru_forward.1} parent=1 // pred_fallthru
      _
    %v30 = vld [vmem:[%s0] sm:$0xff]
    %v31 = vld [vmem:[%s0 + $0x8] sm:$0xff]
    %v32 = vld [vmem:[%s0 + $0x10] sm:$0xff]
    %v33 = vld [vmem:[%s0 + $0x18] sm:$0xff]
    %v34 = vld [vmem:[%s0 + $0x20] sm:$0xff]
    %v35 = vld [vmem:[%s0 + $0x28] sm:$0xff]
    %v36 = vld [vmem:[%s0 + $0x30] sm:$0xff]
    %v37 = vld [vmem:[%s0 + $0x38] sm:$0xff]
    %v38 = vld [vmem:[#allocation3] sm:$0xff]
    %v39 = vld [vmem:[#allocation3 + $0x8] sm:$0xff]
    %v40 = vld [vmem:[#allocation3 + $0x10] sm:$0xff]
    %s41 = scalar_lea.vmem [#allocation3], 408
    %v42 = vld [vmem:[%s41] ss:$8 sm:$0x7]
    %v44 = vperm.slane %v42, 0
    %v45 = vperm.slane %v42, 1
    %v46 = vperm.slane %v42, 2
    %vm50 = vcmask 64512
    %v52 = vsel %vm50, %v30, 0
    %v55 = vsel %vm50, %v31, 0
    %v58 = vsel %vm50, %v32, 0
    %v61 = vsel %vm50, %v33, 0
    %v64 = vsel %vm50, %v34, 0
    %v67 = vsel %vm50, %v35, 0
    %v70 = vsel %vm50, %v36, 0
    %v73 = vsel %vm50, %v37, 0
    %75 = vmatpush.msra.mxu0 0.0
    %76 = vmatpush.msra.mxu0 0.0
    %77 = vmatpush.msra.mxu0 0.0
    %78 = vmatpush.msra.mxu0 0.0
    %79 = vmatpush.msra.mxu0 0.0
    %80 = vmatpush.msra.mxu0 0.0
    %81 = vmatpush.msra.mxu0 0.0
    %82 = vmatpush.msra.mxu0 0.0
    %83 = vmatpush.msra.mxu0 0.0
    %84 = vmatpush.msra.mxu0 0.0
    %85 = vmatpush.msra.mxu0 0.0
    %86 = vmatpush.msra.mxu0 0.0
    %87 = vmatpush.msra.mxu0 0.0
    %88 = vmatpush.msra.mxu0 0.0
    %89 = vmatpush.msra.mxu0 0.0
    %90 = vmatpush.msra.mxu0 %v38
    %91 = vmatmul.f32.gmra.mxu0 %v52
    %v92 = vpop.f32.mrf.mxu0
    %v93 = vadd.f32 %v44, %v92
    %94 = vmatmul.f32.gmra.mxu0 %v55
    %v95 = vpop.f32.mrf.mxu0
    %v96 = vadd.f32 %v44, %v95
    %97 = vmatmul.f32.gmra.mxu0 %v58
    %v98 = vpop.f32.mrf.mxu0
    %v99 = vadd.f32 %v44, %v98
    %100 = vmatmul.f32.gmra.mxu0 %v61
    %v101 = vpop.f32.mrf.mxu0
    %v102 = vadd.f32 %v44, %v101
    %103 = vmatmul.f32.gmra.mxu0 %v64
    %v104 = vpop.f32.mrf.mxu0
    %v105 = vadd.f32 %v44, %v104
    %106 = vmatmul.f32.gmra.mxu0 %v67
    %v107 = vpop.f32.mrf.mxu0
    %v108 = vadd.f32 %v44, %v107
    %109 = vmatmul.f32.gmra.mxu0 %v70
    %v110 = vpop.f32.mrf.mxu0
    %v111 = vadd.f32 %v44, %v110
    %112 = vmatmul.f32.gmra.mxu0 %v73
    %v113 = vpop.f32.mrf.mxu0
    %v114 = vadd.f32 %v44, %v113
    %115 = vdwg.mxu0
    %116 = vmatpush.msra.mxu0 0.0
    %117 = vmatpush.msra.mxu0 0.0
    %118 = vmatpush.msra.mxu0 0.0
    %119 = vmatpush.msra.mxu0 0.0
    %120 = vmatpush.msra.mxu0 0.0
    %121 = vmatpush.msra.mxu0 0.0
    %122 = vmatpush.msra.mxu0 0.0
    %123 = vmatpush.msra.mxu0 0.0
    %124 = vmatpush.msra.mxu0 0.0
    %125 = vmatpush.msra.mxu0 0.0
    %126 = vmatpush.msra.mxu0 0.0
    %127 = vmatpush.msra.mxu0 0.0
    %128 = vmatpush.msra.mxu0 0.0
    %129 = vmatpush.msra.mxu0 0.0
    %130 = vmatpush.msra.mxu0 0.0
    %131 = vmatpush.msra.mxu0 %v39
    %132 = vmatmul.f32.gmra.mxu0 %v52
    %v133 = vpop.f32.mrf.mxu0
    %v134 = vadd.f32 %v45, %v133
    %135 = vmatmul.f32.gmra.mxu0 %v55
    %v136 = vpop.f32.mrf.mxu0
    %v137 = vadd.f32 %v45, %v136
    %138 = vmatmul.f32.gmra.mxu0 %v58
    %v139 = vpop.f32.mrf.mxu0
    %v140 = vadd.f32 %v45, %v139
    %141 = vmatmul.f32.gmra.mxu0 %v61
    %v142 = vpop.f32.mrf.mxu0
    %v143 = vadd.f32 %v45, %v142
    %144 = vmatmul.f32.gmra.mxu0 %v64
    %v145 = vpop.f32.mrf.mxu0
    %v146 = vadd.f32 %v45, %v145
    %147 = vmatmul.f32.gmra.mxu0 %v67
    %v148 = vpop.f32.mrf.mxu0
    %v149 = vadd.f32 %v45, %v148
    %150 = vmatmul.f32.gmra.mxu0 %v70
    %v151 = vpop.f32.mrf.mxu0
    %v152 = vadd.f32 %v45, %v151
    %153 = vmatmul.f32.gmra.mxu0 %v73
    %v154 = vpop.f32.mrf.mxu0
    %v155 = vadd.f32 %v45, %v154
    %156 = vdwg.mxu0
    %157 = vmatpush.msra.mxu0 0.0
    %158 = vmatpush.msra.mxu0 0.0
    %159 = vmatpush.msra.mxu0 0.0
    %160 = vmatpush.msra.mxu0 0.0
    %161 = vmatpush.msra.mxu0 0.0
    %162 = vmatpush.msra.mxu0 0.0
    %163 = vmatpush.msra.mxu0 0.0
    %164 = vmatpush.msra.mxu0 0.0
    %165 = vmatpush.msra.mxu0 0.0
    %166 = vmatpush.msra.mxu0 0.0
    %167 = vmatpush.msra.mxu0 0.0
    %168 = vmatpush.msra.mxu0 0.0
    %169 = vmatpush.msra.mxu0 0.0
    %170 = vmatpush.msra.mxu0 0.0
    %171 = vmatpush.msra.mxu0 0.0
    %172 = vmatpush.msra.mxu0 %v40
    %173 = vmatmul.f32.gmra.mxu0 %v52
    %v174 = vpop.f32.mrf.mxu0
    %v175 = vadd.f32 %v46, %v174
    %176 = vmatmul.f32.gmra.mxu0 %v55
    %v177 = vpop.f32.mrf.mxu0
    %v178 = vadd.f32 %v46, %v177
    %179 = vmatmul.f32.gmra.mxu0 %v58
    %v180 = vpop.f32.mrf.mxu0
    %v181 = vadd.f32 %v46, %v180
    %182 = vmatmul.f32.gmra.mxu0 %v61
    %v183 = vpop.f32.mrf.mxu0
    %v184 = vadd.f32 %v46, %v183
    %185 = vmatmul.f32.gmra.mxu0 %v64
    %v186 = vpop.f32.mrf.mxu0
    %v187 = vadd.f32 %v46, %v186
    %188 = vmatmul.f32.gmra.mxu0 %v67
    %v189 = vpop.f32.mrf.mxu0
    %v190 = vadd.f32 %v46, %v189
    %191 = vmatmul.f32.gmra.mxu0 %v70
    %v192 = vpop.f32.mrf.mxu0
    %v193 = vadd.f32 %v46, %v192
    %194 = vmatmul.f32.gmra.mxu0 %v73
    %v195 = vpop.f32.mrf.mxu0
    %v196 = vadd.f32 %v46, %v195
    %197 = vdwg.mxu0
    %198 = vst [vmem:[#allocation2] sm:$0xff] %v93
    %199 = vst [vmem:[#allocation2 + $0x8] sm:$0xff] %v134
    %200 = vst [vmem:[#allocation2 + $0x10] sm:$0xff] %v175
    %201 = vst [vmem:[#allocation2 + $0x18] sm:$0xff] %v96
    %202 = vst [vmem:[#allocation2 + $0x20] sm:$0xff] %v137
    %203 = vst [vmem:[#allocation2 + $0x28] sm:$0xff] %v178
    %204 = vst [vmem:[#allocation2 + $0x30] sm:$0xff] %v99
    %205 = vst [vmem:[#allocation2 + $0x38] sm:$0xff] %v140
    %206 = vst [vmem:[#allocation2 + $0x40] sm:$0xff] %v181
    %207 = vst [vmem:[#allocation2 + $0x48] sm:$0xff] %v102
    %208 = vst [vmem:[#allocation2 + $0x50] sm:$0xff] %v143
    %209 = vst [vmem:[#allocation2 + $0x58] sm:$0xff] %v184
    %210 = vst [vmem:[#allocation2 + $0x60] sm:$0xff] %v105
    %211 = vst [vmem:[#allocation2 + $0x68] sm:$0xff] %v146
    %212 = vst [vmem:[#allocation2 + $0x70] sm:$0xff] %v187
    %213 = vst [vmem:[#allocation2 + $0x78] sm:$0xff] %v108
    %214 = vst [vmem:[#allocation2 + $0x80] sm:$0xff] %v149
    %215 = vst [vmem:[#allocation2 + $0x88] sm:$0xff] %v190
    %216 = vst [vmem:[#allocation2 + $0x90] sm:$0xff] %v111
    %217 = vst [vmem:[#allocation2 + $0x98] sm:$0xff] %v152
    %218 = vst [vmem:[#allocation2 + $0xa0] sm:$0xff] %v193
    %219 = vst [vmem:[#allocation2 + $0xa8] sm:$0xff] %v114
    %220 = vst [vmem:[#allocation2 + $0xb0] sm:$0xff] %v155
    %221 = vst [vmem:[#allocation2 + $0xb8] sm:$0xff] %v196
    %v222 = vld [vmem:[#allocation2] sm:$0xff]
    %v223 = vld [vmem:[#allocation2 + $0x8] sm:$0xff]
    %v224 = vld [vmem:[#allocation2 + $0x10] sm:$0xff]
    %v225 = vld [vmem:[#allocation3 + $0x18] sm:$0xff]
    %v226 = vld [vmem:[#allocation3 + $0x20] sm:$0xff]
    %v227 = vld [vmem:[#allocation3 + $0x28] sm:$0xff]
    %v228 = vld [vmem:[#allocation3 + $0x30] sm:$0xff]
    %v229 = vld [vmem:[#allocation3 + $0x38] sm:$0xff]
    %v230 = vld [vmem:[#allocation3 + $0x40] sm:$0xff]
    %v231 = vld [vmem:[#allocation3 + $0x48] sm:$0xff]
    %v232 = vld [vmem:[#allocation3 + $0x50] sm:$0xff]
    %v233 = vld [vmem:[#allocation3 + $0x58] sm:$0xff]
    %v234 = vld [vmem:[#allocation3 + $0x60] sm:$0xff]
    %v235 = vld [vmem:[#allocation3 + $0x68] sm:$0xff]
    %v236 = vld [vmem:[#allocation3 + $0x70] sm:$0xff]
    %v237 = vld [vmem:[#allocation3 + $0x78] sm:$0xff]
    %v238 = vld [vmem:[#allocation3 + $0x80] sm:$0xff]
    %v239 = vld [vmem:[#allocation3 + $0x88] sm:$0xff]
    %v240 = vld [vmem:[#allocation3 + $0x90] sm:$0xff]
    %v241 = vld [vmem:[#allocation3 + $0x98] sm:$0xff]
    %v242 = vld [vmem:[#allocation3 + $0xa0] sm:$0xff]
    %v243 = vld [vmem:[#allocation3 + $0xa8] sm:$0xff]
    %v244 = vld [vmem:[#allocation3 + $0xb0] sm:$0xff]
    %v245 = vld [vmem:[#allocation3 + $0xb8] sm:$0xff]
    %v246 = vld [vmem:[#allocation3 + $0xc0] sm:$0xff]
    %v247 = vld [vmem:[#allocation3 + $0xc8] sm:$0xff]
    %v248 = vld [vmem:[#allocation3 + $0xd0] sm:$0xff]
    %v249 = vld [vmem:[#allocation3 + $0xd8] sm:$0xff]
    %v250 = vld [vmem:[#allocation3 + $0xe0] sm:$0xff]
    %v251 = vld [vmem:[#allocation3 + $0xe8] sm:$0xff]
    %v252 = vld [vmem:[#allocation3 + $0xf0] sm:$0xff]
    %v253 = vld [vmem:[#allocation3 + $0xf8] sm:$0xff]
    %v254 = vld [vmem:[#allocation3 + $0x100] sm:$0xff]
    %v255 = vld [vmem:[#allocation3 + $0x108] sm:$0xff]
    %v256 = vld [vmem:[#allocation3 + $0x110] sm:$0xff]
    %v257 = vld [vmem:[#allocation3 + $0x118] sm:$0xff]
    %v258 = vld [vmem:[#allocation3 + $0x120] sm:$0xff]
    %v259 = vld [vmem:[#allocation3 + $0x128] sm:$0xff]
    %v260 = vld [vmem:[#allocation3 + $0x130] sm:$0xff]
    %v261 = vld [vmem:[#allocation3 + $0x138] sm:$0xff]
    %v262 = vld [vmem:[#allocation3 + $0x140] sm:$0xff]
    %v263 = vld [vmem:[#allocation3 + $0x148] sm:$0xff]
    %v264 = vld [vmem:[#allocation3 + $0x150] sm:$0xff]
    %v265 = vld [vmem:[#allocation3 + $0x158] sm:$0xff]
    %v266 = vld [vmem:[#allocation3 + $0x160] sm:$0xff]
    %v267 = vld [vmem:[#allocation3 + $0x168] sm:$0xff]
    %v268 = vld [vmem:[#allocation3 + $0x170] sm:$0xff]
    %v269 = vld [vmem:[#allocation3 + $0x178] sm:$0xff]
    %v270 = vld [vmem:[#allocation3 + $0x180] sm:$0xff]
    %v271 = vld [vmem:[#allocation3 + $0x188] sm:$0xff]
    %v272 = vld [vmem:[#allocation3 + $0x190] sm:$0xff]
    %s273 = scalar_lea.vmem [#allocation3], 409
    %v274 = vld [vmem:[%s273] ss:$8 sm:$0x7]
    %v276 = vperm.slane %v274, 0
    %v277 = vperm.slane %v274, 1
    %v278 = vperm.slane %v274, 2
    %282 = vmatpush.msra.mxu0 %v270
    %283 = vmatpush.msra.mxu0 %v267
    %284 = vmatpush.msra.mxu0 %v264
    %285 = vmatpush.msra.mxu0 %v261
    %286 = vmatpush.msra.mxu0 %v258
    %287 = vmatpush.msra.mxu0 %v255
    %288 = vmatpush.msra.mxu0 %v252
    %289 = vmatpush.msra.mxu0 %v249
    %290 = vmatpush.msra.mxu0 %v246
    %291 = vmatpush.msra.mxu0 %v243
    %292 = vmatpush.msra.mxu0 %v240
    %293 = vmatpush.msra.mxu0 %v237
    %294 = vmatpush.msra.mxu0 %v234
    %295 = vmatpush.msra.mxu0 %v231
    %296 = vmatpush.msra.mxu0 %v228
    %297 = vmatpush.msra.mxu0 %v225
    %298 = vmatmul.f32.gmra.mxu0 0.0
    %v299 = vpop.f32.mrf.mxu0
    %v300 = vadd.f32 %v276, %v299
    %301 = vdwg.mxu0
    %302 = vmatpush.msra.mxu0 %v271
    %303 = vmatpush.msra.mxu0 %v268
    %304 = vmatpush.msra.mxu0 %v265
    %305 = vmatpush.msra.mxu0 %v262
    %306 = vmatpush.msra.mxu0 %v259
    %307 = vmatpush.msra.mxu0 %v256
    %308 = vmatpush.msra.mxu0 %v253
    %309 = vmatpush.msra.mxu0 %v250
    %310 = vmatpush.msra.mxu0 %v247
    %311 = vmatpush.msra.mxu0 %v244
    %312 = vmatpush.msra.mxu0 %v241
    %313 = vmatpush.msra.mxu0 %v238
    %314 = vmatpush.msra.mxu0 %v235
    %315 = vmatpush.msra.mxu0 %v232
    %316 = vmatpush.msra.mxu0 %v229
    %317 = vmatpush.msra.mxu0 %v226
    %318 = vmatmul.f32.gmra.mxu0 0.0
    %v319 = vpop.f32.mrf.mxu0
    %v320 = vadd.f32 %v277, %v319
    %321 = vdwg.mxu0
    %322 = vmatpush.msra.mxu0 %v272
    %323 = vmatpush.msra.mxu0 %v269
    %324 = vmatpush.msra.mxu0 %v266
    %325 = vmatpush.msra.mxu0 %v263
    %326 = vmatpush.msra.mxu0 %v260
    %327 = vmatpush.msra.mxu0 %v257
    %328 = vmatpush.msra.mxu0 %v254
    %329 = vmatpush.msra.mxu0 %v251
    %330 = vmatpush.msra.mxu0 %v248
    %331 = vmatpush.msra.mxu0 %v245
    %332 = vmatpush.msra.mxu0 %v242
    %333 = vmatpush.msra.mxu0 %v239
    %334 = vmatpush.msra.mxu0 %v236
    %335 = vmatpush.msra.mxu0 %v233
    %336 = vmatpush.msra.mxu0 %v230
    %337 = vmatpush.msra.mxu0 %v227
    %338 = vmatmul.f32.gmra.mxu0 0.0
    %v339 = vpop.f32.mrf.mxu0
    %v340 = vadd.f32 %v278, %v339
    %341 = vdwg.mxu0
    %v342 = vadd.f32 %v222, %v300
    %v343 = vadd.f32 %v223, %v320
    %v344 = vmul.f32 %v342, 0.5
    %v345 = vmul.f32 %v343, 0.5
    %v346 = vtanh.pop %v344
    %v347 = vtanh.pop %v345
    %v348 = vadd.f32 %v346, 1.0
    %v349 = vadd.f32 %v347, 1.0
    %v350 = vmul.f32 %v348, 0.5
    %v351 = vmul.f32 %v349, 0.5
    %v352 = vmul.f32 %v350, %v340
    %v353 = vadd.f32 %v224, %v352
    %v354 = vtanh.pop %v353
    %v355 = vsub.f32 1.0, %v351
    %v356 = vmul.f32 %v355, %v354
    %v357 = vmul.f32 %v351, 0.0
    %v358 = vadd.f32 %v356, %v357
    %v359 = vld [vmem:[#allocation2 + $0x18] sm:$0xff]
    %v360 = vld [vmem:[#allocation2 + $0x20] sm:$0xff]
    %v361 = vld [vmem:[#allocation2 + $0x28] sm:$0xff]
    %362 = vmatpush.msra.mxu0 %v270
    %363 = vmatpush.msra.mxu0 %v267
    %364 = vmatpush.msra.mxu0 %v264
    %365 = vmatpush.msra.mxu0 %v261
    %366 = vmatpush.msra.mxu0 %v258
    %367 = vmatpush.msra.mxu0 %v255
    %368 = vmatpush.msra.mxu0 %v252
    %369 = vmatpush.msra.mxu0 %v249
    %370 = vmatpush.msra.mxu0 %v246
    %371 = vmatpush.msra.mxu0 %v243
    %372 = vmatpush.msra.mxu0 %v240
    %373 = vmatpush.msra.mxu0 %v237
    %374 = vmatpush.msra.mxu0 %v234
    %375 = vmatpush.msra.mxu0 %v231
    %376 = vmatpush.msra.mxu0 %v228
    %377 = vmatpush.msra.mxu0 %v225
    %378 = vmatmul.f32.gmra.mxu0 %v358
    %v379 = vpop.f32.mrf.mxu0
    %v380 = vadd.f32 %v276, %v379
    %381 = vdwg.mxu0
    %382 = vmatpush.msra.mxu0 %v271
    %383 = vmatpush.msra.mxu0 %v268
    %384 = vmatpush.msra.mxu0 %v265
    %385 = vmatpush.msra.mxu0 %v262
    %386 = vmatpush.msra.mxu0 %v259
    %387 = vmatpush.msra.mxu0 %v256
    %388 = vmatpush.msra.mxu0 %v253
    %389 = vmatpush.msra.mxu0 %v250
    %390 = vmatpush.msra.mxu0 %v247
    %391 = vmatpush.msra.mxu0 %v244
    %392 = vmatpush.msra.mxu0 %v241
    %393 = vmatpush.msra.mxu0 %v238
    %394 = vmatpush.msra.mxu0 %v235
    %395 = vmatpush.msra.mxu0 %v232
    %396 = vmatpush.msra.mxu0 %v229
    %397 = vmatpush.msra.mxu0 %v226
    %398 = vmatmul.f32.gmra.mxu0 %v358
    %v399 = vpop.f32.mrf.mxu0
    %v400 = vadd.f32 %v277, %v399
    %401 = vdwg.mxu0
    %402 = vmatpush.msra.mxu0 %v272
    %403 = vmatpush.msra.mxu0 %v269
    %404 = vmatpush.msra.mxu0 %v266
    %405 = vmatpush.msra.mxu0 %v263
    %406 = vmatpush.msra.mxu0 %v260
    %407 = vmatpush.msra.mxu0 %v257
    %408 = vmatpush.msra.mxu0 %v254
    %409 = vmatpush.msra.mxu0 %v251
    %410 = vmatpush.msra.mxu0 %v248
    %411 = vmatpush.msra.mxu0 %v245
    %412 = vmatpush.msra.mxu0 %v242
    %413 = vmatpush.msra.mxu0 %v239
    %414 = vmatpush.msra.mxu0 %v236
    %415 = vmatpush.msra.mxu0 %v233
    %416 = vmatpush.msra.mxu0 %v230
    %417 = vmatpush.msra.mxu0 %v227
    %418 = vmatmul.f32.gmra.mxu0 %v358
    %v419 = vpop.f32.mrf.mxu0
    %v420 = vadd.f32 %v278, %v419
    %421 = vdwg.mxu0
    %v422 = vadd.f32 %v359, %v380
    %v423 = vadd.f32 %v360, %v400
    %v424 = vmul.f32 %v422, 0.5
    %v425 = vmul.f32 %v423, 0.5
    %v426 = vtanh.pop %v424
    %v427 = vtanh.pop %v425
    %v428 = vadd.f32 %v426, 1.0
    %v429 = vadd.f32 %v427, 1.0
    %v430 = vmul.f32 %v428, 0.5
    %v431 = vmul.f32 %v429, 0.5
    %v432 = vmul.f32 %v430, %v420
    %v433 = vadd.f32 %v361, %v432
    %v434 = vtanh.pop %v433
    %v435 = vsub.f32 1.0, %v431
    %v436 = vmul.f32 %v435, %v434
    %v437 = vmul.f32 %v431, %v358
    %v438 = vadd.f32 %v436, %v437
    %v439 = vld [vmem:[#allocation2 + $0x30] sm:$0xff]
    %v440 = vld [vmem:[#allocation2 + $0x38] sm:$0xff]
    %v441 = vld [vmem:[#allocation2 + $0x40] sm:$0xff]
    %442 = vmatpush.msra.mxu0 %v270
    %443 = vmatpush.msra.mxu0 %v267
    %444 = vmatpush.msra.mxu0 %v264
    %445 = vmatpush.msra.mxu0 %v261
    %446 = vmatpush.msra.mxu0 %v258
    %447 = vmatpush.msra.mxu0 %v255
    %448 = vmatpush.msra.mxu0 %v252
    %449 = vmatpush.msra.mxu0 %v249
    %450 = vmatpush.msra.mxu0 %v246
    %451 = vmatpush.msra.mxu0 %v243
    %452 = vmatpush.msra.mxu0 %v240
    %453 = vmatpush.msra.mxu0 %v237
    %454 = vmatpush.msra.mxu0 %v234
    %455 = vmatpush.msra.mxu0 %v231
    %456 = vmatpush.msra.mxu0 %v228
    %457 = vmatpush.msra.mxu0 %v225
    %458 = vmatmul.f32.gmra.mxu0 %v438
    %v459 = vpop.f32.mrf.mxu0
    %v460 = vadd.f32 %v276, %v459
    %461 = vdwg.mxu0
    %462 = vmatpush.msra.mxu0 %v271
    %463 = vmatpush.msra.mxu0 %v268
    %464 = vmatpush.msra.mxu0 %v265
    %465 = vmatpush.msra.mxu0 %v262
    %466 = vmatpush.msra.mxu0 %v259
    %467 = vmatpush.msra.mxu0 %v256
    %468 = vmatpush.msra.mxu0 %v253
    %469 = vmatpush.msra.mxu0 %v250
    %470 = vmatpush.msra.mxu0 %v247
    %471 = vmatpush.msra.mxu0 %v244
    %472 = vmatpush.msra.mxu0 %v241
    %473 = vmatpush.msra.mxu0 %v238
    %474 = vmatpush.msra.mxu0 %v235
    %475 = vmatpush.msra.mxu0 %v232
    %476 = vmatpush.msra.mxu0 %v229
    %477 = vmatpush.msra.mxu0 %v226
    %478 = vmatmul.f32.gmra.mxu0 %v438
    %v479 = vpop.f32.mrf.mxu0
    %v480 = vadd.f32 %v277, %v479
    %481 = vdwg.mxu0
    %482 = vmatpush.msra.mxu0 %v272
    %483 = vmatpush.msra.mxu0 %v269
    %484 = vmatpush.msra.mxu0 %v266
    %485 = vmatpush.msra.mxu0 %v263
    %486 = vmatpush.msra.mxu0 %v260
    %487 = vmatpush.msra.mxu0 %v257
    %488 = vmatpush.msra.mxu0 %v254
    %489 = vmatpush.msra.mxu0 %v251
    %490 = vmatpush.msra.mxu0 %v248
    %491 = vmatpush.msra.mxu0 %v245
    %492 = vmatpush.msra.mxu0 %v242
    %493 = vmatpush.msra.mxu0 %v239
    %494 = vmatpush.msra.mxu0 %v236
    %495 = vmatpush.msra.mxu0 %v233
    %496 = vmatpush.msra.mxu0 %v230
    %497 = vmatpush.msra.mxu0 %v227
    %498 = vmatmul.f32.gmra.mxu0 %v438
    %v499 = vpop.f32.mrf.mxu0
    %v500 = vadd.f32 %v278, %v499
    %501 = vdwg.mxu0
    %v502 = vadd.f32 %v439, %v460
    %v503 = vadd.f32 %v440, %v480
    %v504 = vmul.f32 %v502, 0.5
    %v505 = vmul.f32 %v503, 0.5
    %v506 = vtanh.pop %v504
    %v507 = vtanh.pop %v505
    %v508 = vadd.f32 %v506, 1.0
    %v509 = vadd.f32 %v507, 1.0
    %v510 = vmul.f32 %v508, 0.5
    %v511 = vmul.f32 %v509, 0.5
    %v512 = vmul.f32 %v510, %v500
    %v513 = vadd.f32 %v441, %v512
    %v514 = vtanh.pop %v513
    %v515 = vsub.f32 1.0, %v511
    %v516 = vmul.f32 %v515, %v514
    %v517 = vmul.f32 %v511, %v438
    %v518 = vadd.f32 %v516, %v517
    %v519 = vld [vmem:[#allocation2 + $0x48] sm:$0xff]
    %v520 = vld [vmem:[#allocation2 + $0x50] sm:$0xff]
    %v521 = vld [vmem:[#allocation2 + $0x58] sm:$0xff]
    %522 = vmatpush.msra.mxu0 %v270
    %523 = vmatpush.msra.mxu0 %v267
    %524 = vmatpush.msra.mxu0 %v264
    %525 = vmatpush.msra.mxu0 %v261
    %526 = vmatpush.msra.mxu0 %v258
    %527 = vmatpush.msra.mxu0 %v255
    %528 = vmatpush.msra.mxu0 %v252
    %529 = vmatpush.msra.mxu0 %v249
    %530 = vmatpush.msra.mxu0 %v246
    %531 = vmatpush.msra.mxu0 %v243
    %532 = vmatpush.msra.mxu0 %v240
    %533 = vmatpush.msra.mxu0 %v237
    %534 = vmatpush.msra.mxu0 %v234
    %535 = vmatpush.msra.mxu0 %v231
    %536 = vmatpush.msra.mxu0 %v228
    %537 = vmatpush.msra.mxu0 %v225
    %538 = vmatmul.f32.gmra.mxu0 %v518
    %v539 = vpop.f32.mrf.mxu0
    %v540 = vadd.f32 %v276, %v539
    %541 = vdwg.mxu0
    %542 = vmatpush.msra.mxu0 %v271
    %543 = vmatpush.msra.mxu0 %v268
    %544 = vmatpush.msra.mxu0 %v265
    %545 = vmatpush.msra.mxu0 %v262
    %546 = vmatpush.msra.mxu0 %v259
    %547 = vmatpush.msra.mxu0 %v256
    %548 = vmatpush.msra.mxu0 %v253
    %549 = vmatpush.msra.mxu0 %v250
    %550 = vmatpush.msra.mxu0 %v247
    %551 = vmatpush.msra.mxu0 %v244
    %552 = vmatpush.msra.mxu0 %v241
    %553 = vmatpush.msra.mxu0 %v238
    %554 = vmatpush.msra.mxu0 %v235
    %555 = vmatpush.msra.mxu0 %v232
    %556 = vmatpush.msra.mxu0 %v229
    %557 = vmatpush.msra.mxu0 %v226
    %558 = vmatmul.f32.gmra.mxu0 %v518
    %v559 = vpop.f32.mrf.mxu0
    %v560 = vadd.f32 %v277, %v559
    %561 = vdwg.mxu0
    %562 = vmatpush.msra.mxu0 %v272
    %563 = vmatpush.msra.mxu0 %v269
    %564 = vmatpush.msra.mxu0 %v266
    %565 = vmatpush.msra.mxu0 %v263
    %566 = vmatpush.msra.mxu0 %v260
    %567 = vmatpush.msra.mxu0 %v257
    %568 = vmatpush.msra.mxu0 %v254
    %569 = vmatpush.msra.mxu0 %v251
    %570 = vmatpush.msra.mxu0 %v248
    %571 = vmatpush.msra.mxu0 %v245
    %572 = vmatpush.msra.mxu0 %v242
    %573 = vmatpush.msra.mxu0 %v239
    %574 = vmatpush.msra.mxu0 %v236
    %575 = vmatpush.msra.mxu0 %v233
    %576 = vmatpush.msra.mxu0 %v230
    %577 = vmatpush.msra.mxu0 %v227
    %578 = vmatmul.f32.gmra.mxu0 %v518
    %v579 = vpop.f32.mrf.mxu0
    %v580 = vadd.f32 %v278, %v579
    %581 = vdwg.mxu0
    %v582 = vadd.f32 %v519, %v540
    %v583 = vadd.f32 %v520, %v560
    %v584 = vmul.f32 %v582, 0.5
    %v585 = vmul.f32 %v583, 0.5
    %v586 = vtanh.pop %v584
    %v587 = vtanh.pop %v585
    %v588 = vadd.f32 %v586, 1.0
    %v589 = vadd.f32 %v587, 1.0
    %v590 = vmul.f32 %v588, 0.5
    %v591 = vmul.f32 %v589, 0.5
    %v592 = vmul.f32 %v590, %v580
    %v593 = vadd.f32 %v521, %v592
    %v594 = vtanh.pop %v593
    %v595 = vsub.f32 1.0, %v591
    %v596 = vmul.f32 %v595, %v594
    %v597 = vmul.f32 %v591, %v518
    %v598 = vadd.f32 %v596, %v597
    %v599 = vld [vmem:[#allocation2 + $0x60] sm:$0xff]
    %v600 = vld [vmem:[#allocation2 + $0x68] sm:$0xff]
    %v601 = vld [vmem:[#allocation2 + $0x70] sm:$0xff]
    %602 = vmatpush.msra.mxu0 %v270
    %603 = vmatpush.msra.mxu0 %v267
    %604 = vmatpush.msra.mxu0 %v264
    %605 = vmatpush.msra.mxu0 %v261
    %606 = vmatpush.msra.mxu0 %v258
    %607 = vmatpush.msra.mxu0 %v255
    %608 = vmatpush.msra.mxu0 %v252
    %609 = vmatpush.msra.mxu0 %v249
    %610 = vmatpush.msra.mxu0 %v246
    %611 = vmatpush.msra.mxu0 %v243
    %612 = vmatpush.msra.mxu0 %v240
    %613 = vmatpush.msra.mxu0 %v237
    %614 = vmatpush.msra.mxu0 %v234
    %615 = vmatpush.msra.mxu0 %v231
    %616 = vmatpush.msra.mxu0 %v228
    %617 = vmatpush.msra.mxu0 %v225
    %618 = vmatmul.f32.gmra.mxu0 %v598
    %v619 = vpop.f32.mrf.mxu0
    %v620 = vadd.f32 %v276, %v619
    %621 = vdwg.mxu0
    %622 = vmatpush.msra.mxu0 %v271
    %623 = vmatpush.msra.mxu0 %v268
    %624 = vmatpush.msra.mxu0 %v265
    %625 = vmatpush.msra.mxu0 %v262
    %626 = vmatpush.msra.mxu0 %v259
    %627 = vmatpush.msra.mxu0 %v256
    %628 = vmatpush.msra.mxu0 %v253
    %629 = vmatpush.msra.mxu0 %v250
    %630 = vmatpush.msra.mxu0 %v247
    %631 = vmatpush.msra.mxu0 %v244
    %632 = vmatpush.msra.mxu0 %v241
    %633 = vmatpush.msra.mxu0 %v238
    %634 = vmatpush.msra.mxu0 %v235
    %635 = vmatpush.msra.mxu0 %v232
    %636 = vmatpush.msra.mxu0 %v229
    %637 = vmatpush.msra.mxu0 %v226
    %638 = vmatmul.f32.gmra.mxu0 %v598
    %v639 = vpop.f32.mrf.mxu0
    %v640 = vadd.f32 %v277, %v639
    %641 = vdwg.mxu0
    %642 = vmatpush.msra.mxu0 %v272
    %643 = vmatpush.msra.mxu0 %v269
    %644 = vmatpush.msra.mxu0 %v266
    %645 = vmatpush.msra.mxu0 %v263
    %646 = vmatpush.msra.mxu0 %v260
    %647 = vmatpush.msra.mxu0 %v257
    %648 = vmatpush.msra.mxu0 %v254
    %649 = vmatpush.msra.mxu0 %v251
    %650 = vmatpush.msra.mxu0 %v248
    %651 = vmatpush.msra.mxu0 %v245
    %652 = vmatpush.msra.mxu0 %v242
    %653 = vmatpush.msra.mxu0 %v239
    %654 = vmatpush.msra.mxu0 %v236
    %655 = vmatpush.msra.mxu0 %v233
    %656 = vmatpush.msra.mxu0 %v230
    %657 = vmatpush.msra.mxu0 %v227
    %658 = vmatmul.f32.gmra.mxu0 %v598
    %v659 = vpop.f32.mrf.mxu0
    %v660 = vadd.f32 %v278, %v659
    %661 = vdwg.mxu0
    %v662 = vadd.f32 %v599, %v620
    %v663 = vadd.f32 %v600, %v640
    %v664 = vmul.f32 %v662, 0.5
    %v665 = vmul.f32 %v663, 0.5
    %v666 = vtanh.pop %v664
    %v667 = vtanh.pop %v665
    %v668 = vadd.f32 %v666, 1.0
    %v669 = vadd.f32 %v667, 1.0
    %v670 = vmul.f32 %v668, 0.5
    %v671 = vmul.f32 %v669, 0.5
    %v672 = vmul.f32 %v670, %v660
    %v673 = vadd.f32 %v601, %v672
    %v674 = vtanh.pop %v673
    %v675 = vsub.f32 1.0, %v671
    %v676 = vmul.f32 %v675, %v674
    %v677 = vmul.f32 %v671, %v598
    %v678 = vadd.f32 %v676, %v677
    %v679 = vld [vmem:[#allocation2 + $0x78] sm:$0xff]
    %v680 = vld [vmem:[#allocation2 + $0x80] sm:$0xff]
    %v681 = vld [vmem:[#allocation2 + $0x88] sm:$0xff]
    %682 = vmatpush.msra.mxu0 %v270
    %683 = vmatpush.msra.mxu0 %v267
    %684 = vmatpush.msra.mxu0 %v264
    %685 = vmatpush.msra.mxu0 %v261
    %686 = vmatpush.msra.mxu0 %v258
    %687 = vmatpush.msra.mxu0 %v255
    %688 = vmatpush.msra.mxu0 %v252
    %689 = vmatpush.msra.mxu0 %v249
    %690 = vmatpush.msra.mxu0 %v246
    %691 = vmatpush.msra.mxu0 %v243
    %692 = vmatpush.msra.mxu0 %v240
    %693 = vmatpush.msra.mxu0 %v237
    %694 = vmatpush.msra.mxu0 %v234
    %695 = vmatpush.msra.mxu0 %v231
    %696 = vmatpush.msra.mxu0 %v228
    %697 = vmatpush.msra.mxu0 %v225
    %698 = vmatmul.f32.gmra.mxu0 %v678
    %v699 = vpop.f32.mrf.mxu0
    %v700 = vadd.f32 %v276, %v699
    %701 = vdwg.mxu0
    %702 = vmatpush.msra.mxu0 %v271
    %703 = vmatpush.msra.mxu0 %v268
    %704 = vmatpush.msra.mxu0 %v265
    %705 = vmatpush.msra.mxu0 %v262
    %706 = vmatpush.msra.mxu0 %v259
    %707 = vmatpush.msra.mxu0 %v256
    %708 = vmatpush.msra.mxu0 %v253
    %709 = vmatpush.msra.mxu0 %v250
    %710 = vmatpush.msra.mxu0 %v247
    %711 = vmatpush.msra.mxu0 %v244
    %712 = vmatpush.msra.mxu0 %v241
    %713 = vmatpush.msra.mxu0 %v238
    %714 = vmatpush.msra.mxu0 %v235
    %715 = vmatpush.msra.mxu0 %v232
    %716 = vmatpush.msra.mxu0 %v229
    %717 = vmatpush.msra.mxu0 %v226
    %718 = vmatmul.f32.gmra.mxu0 %v678
    %v719 = vpop.f32.mrf.mxu0
    %v720 = vadd.f32 %v277, %v719
    %721 = vdwg.mxu0
    %722 = vmatpush.msra.mxu0 %v272
    %723 = vmatpush.msra.mxu0 %v269
    %724 = vmatpush.msra.mxu0 %v266
    %725 = vmatpush.msra.mxu0 %v263
    %726 = vmatpush.msra.mxu0 %v260
    %727 = vmatpush.msra.mxu0 %v257
    %728 = vmatpush.msra.mxu0 %v254
    %729 = vmatpush.msra.mxu0 %v251
    %730 = vmatpush.msra.mxu0 %v248
    %731 = vmatpush.msra.mxu0 %v245
    %732 = vmatpush.msra.mxu0 %v242
    %733 = vmatpush.msra.mxu0 %v239
    %734 = vmatpush.msra.mxu0 %v236
    %735 = vmatpush.msra.mxu0 %v233
    %736 = vmatpush.msra.mxu0 %v230
    %737 = vmatpush.msra.mxu0 %v227
    %738 = vmatmul.f32.gmra.mxu0 %v678
    %v739 = vpop.f32.mrf.mxu0
    %v740 = vadd.f32 %v278, %v739
    %741 = vdwg.mxu0
    %v742 = vadd.f32 %v679, %v700
    %v743 = vadd.f32 %v680, %v720
    %v744 = vmul.f32 %v742, 0.5
    %v745 = vmul.f32 %v743, 0.5
    %v746 = vtanh.pop %v744
    %v747 = vtanh.pop %v745
    %v748 = vadd.f32 %v746, 1.0
    %v749 = vadd.f32 %v747, 1.0
    %v750 = vmul.f32 %v748, 0.5
    %v751 = vmul.f32 %v749, 0.5
    %v752 = vmul.f32 %v750, %v740
    %v753 = vadd.f32 %v681, %v752
    %v754 = vtanh.pop %v753
    %v755 = vsub.f32 1.0, %v751
    %v756 = vmul.f32 %v755, %v754
    %v757 = vmul.f32 %v751, %v678
    %v758 = vadd.f32 %v756, %v757
    %v759 = vld [vmem:[#allocation2 + $0x90] sm:$0xff]
    %v760 = vld [vmem:[#allocation2 + $0x98] sm:$0xff]
    %v761 = vld [vmem:[#allocation2 + $0xa0] sm:$0xff]
    %762 = vmatpush.msra.mxu0 %v270
    %763 = vmatpush.msra.mxu0 %v267
    %764 = vmatpush.msra.mxu0 %v264
    %765 = vmatpush.msra.mxu0 %v261
    %766 = vmatpush.msra.mxu0 %v258
    %767 = vmatpush.msra.mxu0 %v255
    %768 = vmatpush.msra.mxu0 %v252
    %769 = vmatpush.msra.mxu0 %v249
    %770 = vmatpush.msra.mxu0 %v246
    %771 = vmatpush.msra.mxu0 %v243
    %772 = vmatpush.msra.mxu0 %v240
    %773 = vmatpush.msra.mxu0 %v237
    %774 = vmatpush.msra.mxu0 %v234
    %775 = vmatpush.msra.mxu0 %v231
    %776 = vmatpush.msra.mxu0 %v228
    %777 = vmatpush.msra.mxu0 %v225
    %778 = vmatmul.f32.gmra.mxu0 %v758
    %v779 = vpop.f32.mrf.mxu0
    %v780 = vadd.f32 %v276, %v779
    %781 = vdwg.mxu0
    %782 = vmatpush.msra.mxu0 %v271
    %783 = vmatpush.msra.mxu0 %v268
    %784 = vmatpush.msra.mxu0 %v265
    %785 = vmatpush.msra.mxu0 %v262
    %786 = vmatpush.msra.mxu0 %v259
    %787 = vmatpush.msra.mxu0 %v256
    %788 = vmatpush.msra.mxu0 %v253
    %789 = vmatpush.msra.mxu0 %v250
    %790 = vmatpush.msra.mxu0 %v247
    %791 = vmatpush.msra.mxu0 %v244
    %792 = vmatpush.msra.mxu0 %v241
    %793 = vmatpush.msra.mxu0 %v238
    %794 = vmatpush.msra.mxu0 %v235
    %795 = vmatpush.msra.mxu0 %v232
    %796 = vmatpush.msra.mxu0 %v229
    %797 = vmatpush.msra.mxu0 %v226
    %798 = vmatmul.f32.gmra.mxu0 %v758
    %v799 = vpop.f32.mrf.mxu0
    %v800 = vadd.f32 %v277, %v799
    %801 = vdwg.mxu0
    %802 = vmatpush.msra.mxu0 %v272
    %803 = vmatpush.msra.mxu0 %v269
    %804 = vmatpush.msra.mxu0 %v266
    %805 = vmatpush.msra.mxu0 %v263
    %806 = vmatpush.msra.mxu0 %v260
    %807 = vmatpush.msra.mxu0 %v257
    %808 = vmatpush.msra.mxu0 %v254
    %809 = vmatpush.msra.mxu0 %v251
    %810 = vmatpush.msra.mxu0 %v248
    %811 = vmatpush.msra.mxu0 %v245
    %812 = vmatpush.msra.mxu0 %v242
    %813 = vmatpush.msra.mxu0 %v239
    %814 = vmatpush.msra.mxu0 %v236
    %815 = vmatpush.msra.mxu0 %v233
    %816 = vmatpush.msra.mxu0 %v230
    %817 = vmatpush.msra.mxu0 %v227
    %818 = vmatmul.f32.gmra.mxu0 %v758
    %v819 = vpop.f32.mrf.mxu0
    %v820 = vadd.f32 %v278, %v819
    %821 = vdwg.mxu0
    %v822 = vadd.f32 %v759, %v780
    %v823 = vadd.f32 %v760, %v800
    %v824 = vmul.f32 %v822, 0.5
    %v825 = vmul.f32 %v823, 0.5
    %v826 = vtanh.pop %v824
    %v827 = vtanh.pop %v825
    %v828 = vadd.f32 %v826, 1.0
    %v829 = vadd.f32 %v827, 1.0
    %v830 = vmul.f32 %v828, 0.5
    %v831 = vmul.f32 %v829, 0.5
    %v832 = vmul.f32 %v830, %v820
    %v833 = vadd.f32 %v761, %v832
    %v834 = vtanh.pop %v833
    %v835 = vsub.f32 1.0, %v831
    %v836 = vmul.f32 %v835, %v834
    %v837 = vmul.f32 %v831, %v758
    %v838 = vadd.f32 %v836, %v837
    %v839 = vld [vmem:[#allocation2 + $0xa8] sm:$0xff]
    %v840 = vld [vmem:[#allocation2 + $0xb0] sm:$0xff]
    %v841 = vld [vmem:[#allocation2 + $0xb8] sm:$0xff]
    %842 = vmatpush.msra.mxu0 %v270
    %843 = vmatpush.msra.mxu0 %v267
    %844 = vmatpush.msra.mxu0 %v264
    %845 = vmatpush.msra.mxu0 %v261
    %846 = vmatpush.msra.mxu0 %v258
    %847 = vmatpush.msra.mxu0 %v255
    %848 = vmatpush.msra.mxu0 %v252
    %849 = vmatpush.msra.mxu0 %v249
    %850 = vmatpush.msra.mxu0 %v246
    %851 = vmatpush.msra.mxu0 %v243
    %852 = vmatpush.msra.mxu0 %v240
    %853 = vmatpush.msra.mxu0 %v237
    %854 = vmatpush.msra.mxu0 %v234
    %855 = vmatpush.msra.mxu0 %v231
    %856 = vmatpush.msra.mxu0 %v228
    %857 = vmatpush.msra.mxu0 %v225
    %858 = vmatmul.f32.gmra.mxu0 %v838
    %v859 = vpop.f32.mrf.mxu0
    %v860 = vadd.f32 %v276, %v859
    %861 = vdwg.mxu0
    %862 = vmatpush.msra.mxu0 %v271
    %863 = vmatpush.msra.mxu0 %v268
    %864 = vmatpush.msra.mxu0 %v265
    %865 = vmatpush.msra.mxu0 %v262
    %866 = vmatpush.msra.mxu0 %v259
    %867 = vmatpush.msra.mxu0 %v256
    %868 = vmatpush.msra.mxu0 %v253
    %869 = vmatpush.msra.mxu0 %v250
    %870 = vmatpush.msra.mxu0 %v247
    %871 = vmatpush.msra.mxu0 %v244
    %872 = vmatpush.msra.mxu0 %v241
    %873 = vmatpush.msra.mxu0 %v238
    %874 = vmatpush.msra.mxu0 %v235
    %875 = vmatpush.msra.mxu0 %v232
    %876 = vmatpush.msra.mxu0 %v229
    %877 = vmatpush.msra.mxu0 %v226
    %878 = vmatmul.f32.gmra.mxu0 %v838
    %v879 = vpop.f32.mrf.mxu0
    %v880 = vadd.f32 %v277, %v879
    %881 = vdwg.mxu0
    %882 = vmatpush.msra.mxu0 %v272
    %883 = vmatpush.msra.mxu0 %v269
    %884 = vmatpush.msra.mxu0 %v266
    %885 = vmatpush.msra.mxu0 %v263
    %886 = vmatpush.msra.mxu0 %v260
    %887 = vmatpush.msra.mxu0 %v257
    %888 = vmatpush.msra.mxu0 %v254
    %889 = vmatpush.msra.mxu0 %v251
    %890 = vmatpush.msra.mxu0 %v248
    %891 = vmatpush.msra.mxu0 %v245
    %892 = vmatpush.msra.mxu0 %v242
    %893 = vmatpush.msra.mxu0 %v239
    %894 = vmatpush.msra.mxu0 %v236
    %895 = vmatpush.msra.mxu0 %v233
    %896 = vmatpush.msra.mxu0 %v230
    %897 = vmatpush.msra.mxu0 %v227
    %898 = vmatmul.f32.gmra.mxu0 %v838
    %v899 = vpop.f32.mrf.mxu0
    %v900 = vadd.f32 %v278, %v899
    %901 = vdwg.mxu0
    %v902 = vadd.f32 %v839, %v860
    %v903 = vadd.f32 %v840, %v880
    %v904 = vmul.f32 %v902, 0.5
    %v905 = vmul.f32 %v903, 0.5
    %v906 = vtanh.pop %v904
    %v907 = vtanh.pop %v905
    %v908 = vadd.f32 %v906, 1.0
    %v909 = vadd.f32 %v907, 1.0
    %v910 = vmul.f32 %v908, 0.5
    %v911 = vmul.f32 %v909, 0.5
    %v912 = vmul.f32 %v910, %v900
    %v913 = vadd.f32 %v841, %v912
    %v914 = vtanh.pop %v913
    %v915 = vsub.f32 1.0, %v911
    %v916 = vmul.f32 %v915, %v914
    %v917 = vmul.f32 %v911, %v838
    %v918 = vadd.f32 %v916, %v917
    %v919 = vld [vmem:[#allocation3 + $0x1b0] sm:$0xff]
    %v920 = vld [vmem:[#allocation3 + $0x1c8] sm:$0xff]
    %v921 = vld [vmem:[#allocation3 + $0x1e0] sm:$0xff]
    %v922 = vld [vmem:[#allocation3 + $0x1f8] sm:$0xff]
    %v923 = vld [vmem:[#allocation3 + $0x210] sm:$0xff]
    %v924 = vld [vmem:[#allocation3 + $0x228] sm:$0xff]
    %v925 = vld [vmem:[#allocation3 + $0x240] sm:$0xff]
    %v926 = vld [vmem:[#allocation3 + $0x258] sm:$0xff]
    %v927 = vld [vmem:[#allocation3 + $0x270] sm:$0xff]
    %v928 = vld [vmem:[#allocation3 + $0x288] sm:$0xff]
    %v929 = vld [vmem:[#allocation3 + $0x2a0] sm:$0xff]
    %v930 = vld [vmem:[#allocation3 + $0x2b8] sm:$0xff]
    %v931 = vld [vmem:[#allocation3 + $0x2d0] sm:$0xff]
    %v932 = vld [vmem:[#allocation3 + $0x2e8] sm:$0xff]
    %v933 = vld [vmem:[#allocation3 + $0x300] sm:$0xff]
    %v934 = vld [vmem:[#allocation3 + $0x318] sm:$0xff]
    %v935 = vld [vmem:[%s1] sm:$0xff]
    %v936 = vld [vmem:[#allocation3 + $0x330] sm:$0xff]
    %v938 = vsel %vm50, %v935, 0
    %940 = vmatpush.msra.mxu0 0.0
    %941 = vmatpush.msra.mxu0 0.0
    %942 = vmatpush.msra.mxu0 0.0
    %943 = vmatpush.msra.mxu0 0.0
    %944 = vmatpush.msra.mxu0 0.0
    %945 = vmatpush.msra.mxu0 0.0
    %946 = vmatpush.msra.mxu0 0.0
    %947 = vmatpush.msra.mxu0 0.0
    %948 = vmatpush.msra.mxu0 0.0
    %949 = vmatpush.msra.mxu0 0.0
    %950 = vmatpush.msra.mxu0 0.0
    %951 = vmatpush.msra.mxu0 0.0
    %952 = vmatpush.msra.mxu0 0.0
    %953 = vmatpush.msra.mxu0 0.0
    %954 = vmatpush.msra.mxu0 0.0
    %955 = vmatpush.msra.mxu0 %v936
    %956 = vmatmul.f32.gmra.mxu0 %v938
    %v957 = vpop.f32.mrf.mxu0
    %v958 = vadd.f32 0.0, %v957
    %959 = vdwg.mxu0
    %960 = vmatpush.msra.mxu0 %v934
    %961 = vmatpush.msra.mxu0 %v933
    %962 = vmatpush.msra.mxu0 %v932
    %963 = vmatpush.msra.mxu0 %v931
    %964 = vmatpush.msra.mxu0 %v930
    %965 = vmatpush.msra.mxu0 %v929
    %966 = vmatpush.msra.mxu0 %v928
    %967 = vmatpush.msra.mxu0 %v927
    %968 = vmatpush.msra.mxu0 %v926
    %969 = vmatpush.msra.mxu0 %v925
    %970 = vmatpush.msra.mxu0 %v924
    %971 = vmatpush.msra.mxu0 %v923
    %972 = vmatpush.msra.mxu0 %v922
    %973 = vmatpush.msra.mxu0 %v921
    %974 = vmatpush.msra.mxu0 %v920
    %975 = vmatpush.msra.mxu0 %v919
    %976 = vmatmul.f32.gmra.mxu0 %v918
    %v977 = vpop.f32.mrf.mxu0
    %v978 = vadd.f32 %v958, %v977
    %979 = vdwg.mxu0
    %v980 = vld [vmem:[#allocation3 + $0x348] ss:$0 sm:$0xff]
    %v981 = vadd.f32 %v978, %v980
    %v982 = vmax.f32 %v981, 0.0
    %v983 = vld [vmem:[#allocation3 + $0x360] sm:$0xff]
    %v984 = vld [vmem:[#allocation3 + $0x378] sm:$0xff]
    %v985 = vld [vmem:[#allocation3 + $0x390] sm:$0xff]
    %v986 = vld [vmem:[#allocation3 + $0x3a8] sm:$0xff]
    %v987 = vld [vmem:[#allocation3 + $0x3c0] sm:$0xff]
    %v988 = vld [vmem:[#allocation3 + $0x3d8] sm:$0xff]
    %v989 = vld [vmem:[#allocation3 + $0x3f0] sm:$0xff]
    %v990 = vld [vmem:[#allocation3 + $0x408] sm:$0xff]
    %v991 = vld [vmem:[#allocation3 + $0x420] sm:$0xff]
    %v992 = vld [vmem:[#allocation3 + $0x438] sm:$0xff]
    %v993 = vld [vmem:[#allocation3 + $0x450] sm:$0xff]
    %v994 = vld [vmem:[#allocation3 + $0x468] sm:$0xff]
    %v995 = vld [vmem:[#allocation3 + $0x480] sm:$0xff]
    %v996 = vld [vmem:[#allocation3 + $0x498] sm:$0xff]
    %v997 = vld [vmem:[#allocation3 + $0x4b0] sm:$0xff]
    %v998 = vld [vmem:[#allocation3 + $0x4c8] sm:$0xff]
    %v999 = vld [vmem:[#allocation3 + $0x4e0] ss:$0 sm:$0xff]
    %1000 = vmatpush.msra.mxu0 %v998
    %1001 = vmatpush.msra.mxu0 %v997
    %1002 = vmatpush.msra.mxu0 %v996
    %1003 = vmatpush.msra.mxu0 %v995
    %1004 = vmatpush.msra.mxu0 %v994
    %1005 = vmatpush.msra.mxu0 %v993
    %1006 = vmatpush.msra.mxu0 %v992
    %1007 = vmatpush.msra.mxu0 %v991
    %1008 = vmatpush.msra.mxu0 %v990
    %1009 = vmatpush.msra.mxu0 %v989
    %1010 = vmatpush.msra.mxu0 %v988
    %1011 = vmatpush.msra.mxu0 %v987
    %1012 = vmatpush.msra.mxu0 %v986
    %1013 = vmatpush.msra.mxu0 %v985
    %1014 = vmatpush.msra.mxu0 %v984
    %1015 = vmatpush.msra.mxu0 %v983
    %1016 = vmatmul.f32.gmra.mxu0 %v982
    %v1017 = vpop.f32.mrf.mxu0
    %v1018 = vadd.f32 %v999, %v1017
    %1019 = vdwg.mxu0
    %1020 = vst [vmem:[%s3] sm:$0xff] %v1018
    // Predicated region
    $region18: #{gru_forward.1} parent=1 // pred_check
      _
    $region19: #{gru_forward.1} parent=1 // pred_check_branch
      %1022 = sbr.rel (0) target = $region21
    $region20: #{gru_forward.1} parent=1 // pred_region
      _
    $region21: #{gru_forward.1} parent=1 // pred_fallthru
      _
    // Predicated region
    $region22: #{gru_forward.1} parent=1 // pred_check
      _
    $region23: #{gru_forward.1} parent=1 // pred_check_branch
      %1024 = sbr.rel (0) target = $region25
    $region24: #{gru_forward.1} parent=1 // pred_region
      _
    $region25: #{gru_forward.1} parent=1 // pred_fallthru
      _
    %1025 = vsyncpa [#allocation4], 1

</llo_original>
